<compile_context>
chip_gen: v7x
topology: tpu7x:2x2x1
jax: 0.10.0
libtpu: 0.0.40
codegen_flags: <defaults>
</compile_context>

<pallas_src>
import functools

import jax
import jax.numpy as jnp
import numpy as np
from jax.experimental import pallas as pl
from jax.experimental.pallas import tpu as pltpu


# ----------------------------- Pallas kernel -------------------------------

def _vae_fwd_kernel(
    xin_ref,
    w1_ref, b1_ref, w2_ref, b2_ref,
    wmulv_ref, bmulv_ref,
    wd1_ref, bd1_ref, wd2_ref, bd2_ref,
    whead_ref, bhead_ref,
    out_ref,
    *, input_dim, latent_dim, num_numerical, cardinality, out_width,
):
    f32 = jnp.float32
    xin = xin_ref[...]
    x = xin[:, :input_dim]
    eps = xin[:, input_dim:input_dim + latent_dim]

    # ---- encoder ----
    h = jnp.dot(x, w1_ref[...], preferred_element_type=f32) + b1_ref[...]
    h = jnp.maximum(h, 0.0)                       # ReLU (dropout = identity)
    h = jnp.dot(h, w2_ref[...], preferred_element_type=f32) + b2_ref[...]
    h = jnp.maximum(h, 0.0)

    # ---- latent heads: fused mu|logvar matmul ----
    mulv = jnp.dot(h, wmulv_ref[...], preferred_element_type=f32) + bmulv_ref[...]
    mu = mulv[:, :latent_dim]
    logvar = mulv[:, latent_dim:2 * latent_dim]
    # latent_dim = 2 <= 16: no tanh / clamp branch.

    # ---- reparameterization (noise_scale = 1.0 for latent_dim <= 2) ----
    z = mu + eps * jnp.exp(0.5 * logvar)

    # ---- decoder (tiny-K first matmul stays on the otherwise-idle MXU) ----
    hd = jnp.dot(z, wd1_ref[...], preferred_element_type=f32) + bd1_ref[...]
    hd = jnp.maximum(hd, 0.0)
    hd = jnp.dot(hd, wd2_ref[...], preferred_element_type=f32) + bd2_ref[...]
    hd = jnp.maximum(hd, 0.0)

    # ---- output heads: fused numerical|categorical matmul ----
    head = jnp.dot(hd, whead_ref[...], preferred_element_type=f32) + bhead_ref[...]

    # In-place masked softmax over the categorical lanes [nn, nn+card).
    lane = jax.lax.broadcasted_iota(jnp.int32, head.shape, 1)
    is_cat = (lane >= num_numerical) & (lane < num_numerical + cardinality)
    masked = jnp.where(is_cat, head, -jnp.inf)
    m = jnp.max(masked, axis=1, keepdims=True)
    e = jnp.exp(masked - m)                       # non-cat lanes -> exp(-inf)=0
    denom = jnp.sum(e, axis=1, keepdims=True)
    probs = e * pl.reciprocal(denom)              # exact; EUP is idle anyway
    head = jnp.where(is_cat, probs, head)         # [ x_num | probs ]

    # ---- single lane-dense packed store: [x_num | probs | mu | logvar | 0s] ----
    pad = out_width - (num_numerical + cardinality + 2 * latent_dim)
    out_ref[...] = jnp.concatenate(
        [head, mulv, jnp.zeros((head.shape[0], pad), f32)], axis=1)


# ----------------------------- wrapper --------------------------------------

def adaptive_vae_forward(x, eps, params, *, block_b=2048, min_grid=2):
    """Fused AdaptiveVAE forward pass, tiled over the batch dimension.

    x:   (B, input_dim) float32
    eps: (B, latent_dim) float32 standard-normal noise for reparameterization
    params: dict of (in,out) weights and (1,out) biases (see layout comment)
    Returns: (x_numerical, cat_probs, mu, logvar)
    """
    B, input_dim = x.shape
    latent_dim = params["wmu"].shape[1]
    num_numerical = params["wnum"].shape[1]
    cardinality = params["wcat"].shape[1]
    out_total = num_numerical + cardinality + 2 * latent_dim
    out_w = pl.cdiv(out_total, 128) * 128         # lane-dense packed output

    # Fuse the tiny latent / output-head matmuls in the wrapper.
    wmulv = jnp.concatenate([params["wmu"], params["wlv"]], axis=1)
    bmulv = jnp.concatenate([params["bmu"], params["blv"]], axis=1)
    whead = jnp.concatenate([params["wnum"], params["wcat"]], axis=1)
    bhead = jnp.concatenate([params["bnum"], params["bcat"]], axis=1)

    # Batch tile: as large as possible (overhead-bound kernel), but keep at
    # least `min_grid` steps so both TensorCores get work on v7x.
    tb = min(block_b, max(8, -(-B // min_grid)))
    tb = max(8, (tb // 8) * 8)
    b_pad = pl.cdiv(B, tb) * tb

    # Merge eps into the x stream: one input DMA instead of two.
    x_in = jnp.concatenate([x, eps], axis=1)
    if b_pad != B:
        x_in = jnp.pad(x_in, ((0, b_pad - B), (0, 0)))

    weights = [
        params["w1"], params["b1"], params["w2"], params["b2"],
        wmulv, bmulv,
        params["wd1"], params["bd1"], params["wd2"], params["bd2"],
        whead, bhead,
    ]

    def resident_spec(arr):
        # Full-array block, constant block index -> stays VMEM-resident.
        return pl.BlockSpec(arr.shape, lambda i: (0, 0))

    in_specs = (
        [pl.BlockSpec((tb, input_dim + latent_dim), lambda i: (i, 0))]  # x|eps tile
        + [resident_spec(w) for w in weights]
    )
    out_spec = pl.BlockSpec((tb, out_w), lambda i: (i, 0))

    kernel = functools.partial(
        _vae_fwd_kernel,
        input_dim=input_dim,
        latent_dim=latent_dim,
        num_numerical=num_numerical,
        cardinality=cardinality,
        out_width=out_w,
    )

    # Advisory cost estimate (this is a tiny, overhead-dominated kernel).
    h1 = params["w1"].shape[1]
    h2 = params["w2"].shape[1]
    d1 = params["wd1"].shape[1]
    d2 = params["wd2"].shape[1]
    flops = 2 * b_pad * (
        input_dim * h1 + h1 * h2 + h2 * (2 * latent_dim)
        + latent_dim * d1 + d1 * d2 + d2 * (num_numerical + cardinality))
    transcendentals = b_pad * (latent_dim + num_numerical + cardinality + 1)
    bytes_accessed = 4 * (
        b_pad * (input_dim + latent_dim) + b_pad * out_w
        + int(sum(int(np.prod(w.shape)) for w in weights)))
    cost = pl.CostEstimate(flops=int(flops),
                           transcendentals=int(transcendentals),
                           bytes_accessed=int(bytes_accessed))

    packed = pl.pallas_call(
        kernel,
        out_shape=jax.ShapeDtypeStruct((b_pad, out_w), jnp.float32),
        grid=(b_pad // tb,),
        in_specs=in_specs,
        out_specs=out_spec,
        compiler_params=pltpu.CompilerParams(
            dimension_semantics=("parallel",),
        ),
        cost_estimate=cost,
    )(x_in, *weights)

    packed = packed[:B]
    nn_ = num_numerical
    nc = num_numerical + cardinality
    x_num = packed[:, 0:nn_]
    probs = packed[:, nn_:nc]
    mu = packed[:, nc:nc + latent_dim]
    logvar = packed[:, nc + latent_dim:nc + 2 * latent_dim]
    return x_num, probs, mu, logvar


# ----------------------------- parameter init -------------------------------

def _kaiming_linear(key, fan_in, fan_out):
    """He/kaiming normal, mode='fan_out', relu gain; returns (in,out) weight."""
    std = np.sqrt(2.0 / fan_out)
    w = jax.random.normal(key, (fan_in, fan_out), dtype=jnp.float32) * std
    b = jnp.zeros((1, fan_out), dtype=jnp.float32)
    return w, b


def make_params(key, input_dim, hidden_dim, latent_dim, num_numerical, cardinality):
    keys = jax.random.split(key, 8)
    p = {}
    p["w1"], p["b1"] = _kaiming_linear(keys[0], input_dim, hidden_dim)
    p["w2"], p["b2"] = _kaiming_linear(keys[1], hidden_dim, hidden_dim // 2)
    p["wmu"], p["bmu"] = _kaiming_linear(keys[2], hidden_dim // 2, latent_dim)
    p["wlv"], p["blv"] = _kaiming_linear(keys[3], hidden_dim // 2, latent_dim)
    p["wd1"], p["bd1"] = _kaiming_linear(keys[4], latent_dim, hidden_dim // 2)
    p["wd2"], p["bd2"] = _kaiming_linear(keys[5], hidden_dim // 2, hidden_dim)
    p["wnum"], p["bnum"] = _kaiming_linear(keys[6], hidden_dim, num_numerical)
    p["wcat"], p["bcat"] = _kaiming_linear(keys[7], hidden_dim, cardinality)
    return p


# ----------------------------- pure-JAX reference ----------------------------

def reference_forward(x, eps, p):
    relu = lambda v: jnp.maximum(v, 0.0)
    h = relu(x @ p["w1"] + p["b1"])
    h = relu(h @ p["w2"] + p["b2"])
    mu = h @ p["wmu"] + p["bmu"]
    logvar = h @ p["wlv"] + p["blv"]
    z = mu + eps * jnp.exp(0.5 * logvar)
    hd = relu(z @ p["wd1"] + p["bd1"])
    hd = relu(hd @ p["wd2"] + p["bd2"])
    x_num = hd @ p["wnum"] + p["bnum"]
    logits = hd @ p["wcat"] + p["bcat"]
    probs = jax.nn.softmax(logits, axis=1)
    return x_num, probs, mu, logvar


# ----------------------------- main ------------------------------------------

if __name__ == "__main__":
    # Module-consistent shapes; batch sized so the grid tiles into 2 steps
    # (both TensorCores active on v7x, negligible cost on single-TC chips).
    B = 256
    INPUT_DIM = 32
    HIDDEN_DIM = 64
    LATENT_DIM = 2          # default -> "latent_dim <= 4" encoder/decoder paths
    NUM_NUMERICAL = 6
    CARDINALITY = 5         # one categorical feature in cat_dict

    root = jax.random.PRNGKey(0)
    k_x, k_eps, k_params = jax.random.split(root, 3)

    x = jax.random.normal(k_x, (B, INPUT_DIM), dtype=jnp.float32)
    eps = jax.random.normal(k_eps, (B, LATENT_DIM), dtype=jnp.float32)
    params = make_params(k_params, INPUT_DIM, HIDDEN_DIM, LATENT_DIM,
                         NUM_NUMERICAL, CARDINALITY)

    outs = adaptive_vae_forward(x, eps, params)
    outs = jax.block_until_ready(outs)

    refs = reference_forward(x, eps, params)
    names = ["numerical", "cat_probs", "mu", "logvar"]
    for name, o, r in zip(names, outs, refs):
        np.testing.assert_allclose(np.asarray(o), np.asarray(r),
                                   rtol=1e-4, atol=1e-5)

    print("KERNEL_OK")
</pallas_src>

<mosaic_0001>
module attributes {stable_mosaic.version = 11 : i64} {
  func.func @_vae_fwd_kernel(%arg0: i32, %arg1: memref<128x34xf32, #tpu.memory_space<vmem>>, %arg2: memref<32x64xf32, #tpu.memory_space<vmem>>, %arg3: memref<1x64xf32, #tpu.memory_space<vmem>>, %arg4: memref<64x32xf32, #tpu.memory_space<vmem>>, %arg5: memref<1x32xf32, #tpu.memory_space<vmem>>, %arg6: memref<32x4xf32, #tpu.memory_space<vmem>>, %arg7: memref<1x4xf32, #tpu.memory_space<vmem>>, %arg8: memref<2x32xf32, #tpu.memory_space<vmem>>, %arg9: memref<1x32xf32, #tpu.memory_space<vmem>>, %arg10: memref<32x64xf32, #tpu.memory_space<vmem>>, %arg11: memref<1x64xf32, #tpu.memory_space<vmem>>, %arg12: memref<64x11xf32, #tpu.memory_space<vmem>>, %arg13: memref<1x11xf32, #tpu.memory_space<vmem>>, %arg14: memref<128x128xf32, #tpu.memory_space<vmem>>) attributes {dimension_semantics = [#tpu.dimension_semantics<parallel>], iteration_bounds = array<i64: 2>, scalar_prefetch = 0 : i64, scratch_operands = 0 : i64, tpu.core_type = #tpu.core_type<tc>, window_params = [{transform_indices = @transform_0, window_bounds = array<i64: 128, 34>}, {pipeline_mode = #tpu.pipeline_mode<synchronous>, transform_indices = @transform_1, window_bounds = array<i64: 32, 64>}, {pipeline_mode = #tpu.pipeline_mode<synchronous>, transform_indices = @transform_2, window_bounds = array<i64: 1, 64>}, {pipeline_mode = #tpu.pipeline_mode<synchronous>, transform_indices = @transform_3, window_bounds = array<i64: 64, 32>}, {pipeline_mode = #tpu.pipeline_mode<synchronous>, transform_indices = @transform_4, window_bounds = array<i64: 1, 32>}, {pipeline_mode = #tpu.pipeline_mode<synchronous>, transform_indices = @transform_5, window_bounds = array<i64: 32, 4>}, {pipeline_mode = #tpu.pipeline_mode<synchronous>, transform_indices = @transform_6, window_bounds = array<i64: 1, 4>}, {pipeline_mode = #tpu.pipeline_mode<synchronous>, transform_indices = @transform_7, window_bounds = array<i64: 2, 32>}, {pipeline_mode = #tpu.pipeline_mode<synchronous>, transform_indices = @transform_8, window_bounds = array<i64: 1, 32>}, {pipeline_mode = #tpu.pipeline_mode<synchronous>, transform_indices = @transform_9, window_bounds = array<i64: 32, 64>}, {pipeline_mode = #tpu.pipeline_mode<synchronous>, transform_indices = @transform_10, window_bounds = array<i64: 1, 64>}, {pipeline_mode = #tpu.pipeline_mode<synchronous>, transform_indices = @transform_11, window_bounds = array<i64: 64, 11>}, {pipeline_mode = #tpu.pipeline_mode<synchronous>, transform_indices = @transform_12, window_bounds = array<i64: 1, 11>}, {transform_indices = @transform_13, window_bounds = array<i64: 128, 128>}]} {
    %c0 = arith.constant 0 : index
    %c0_0 = arith.constant 0 : index
    %0 = vector.load %arg1[%c0, %c0_0] : memref<128x34xf32, #tpu.memory_space<vmem>>, vector<128x34xf32>
    %1 = vector.extract_strided_slice %0 {offsets = [0, 0], sizes = [128, 32], strides = [1, 1]} : vector<128x34xf32> to vector<128x32xf32>
    %2 = vector.extract_strided_slice %0 {offsets = [0, 32], sizes = [128, 2], strides = [1, 1]} : vector<128x34xf32> to vector<128x2xf32>
    %c0_1 = arith.constant 0 : index
    %c0_2 = arith.constant 0 : index
    %3 = vector.load %arg2[%c0_1, %c0_2] : memref<32x64xf32, #tpu.memory_space<vmem>>, vector<32x64xf32>
    %cst = arith.constant dense<0.000000e+00> : vector<128x64xf32>
    %4 = tpu.matmul %1, %3, %cst {dimension_numbers = #tpu.dot_dimension_numbers<[1], [0], [0], [1], [0, 0, 1, 1], [], []>} : vector<128x32xf32>, vector<32x64xf32>, vector<128x64xf32> -> vector<128x64xf32>
    %c0_3 = arith.constant 0 : index
    %c0_4 = arith.constant 0 : index
    %5 = vector.load %arg3[%c0_3, %c0_4] : memref<1x64xf32, #tpu.memory_space<vmem>>, vector<1x64xf32>
    %6 = vector.broadcast %5 : vector<1x64xf32> to vector<128x64xf32>
    %7 = arith.addf %4, %6 : vector<128x64xf32>
    %cst_5 = arith.constant 0.000000e+00 : f32
    %8 = vector.broadcast %cst_5 : f32 to vector<128x64xf32>
    %9 = arith.maximumf %7, %8 : vector<128x64xf32>
    %c0_6 = arith.constant 0 : index
    %c0_7 = arith.constant 0 : index
    %10 = vector.load %arg4[%c0_6, %c0_7] : memref<64x32xf32, #tpu.memory_space<vmem>>, vector<64x32xf32>
    %cst_8 = arith.constant dense<0.000000e+00> : vector<128x32xf32>
    %11 = tpu.matmul %9, %10, %cst_8 {dimension_numbers = #tpu.dot_dimension_numbers<[1], [0], [0], [1], [0, 0, 1, 1], [], []>} : vector<128x64xf32>, vector<64x32xf32>, vector<128x32xf32> -> vector<128x32xf32>
    %c0_9 = arith.constant 0 : index
    %c0_10 = arith.constant 0 : index
    %12 = vector.load %arg5[%c0_9, %c0_10] : memref<1x32xf32, #tpu.memory_space<vmem>>, vector<1x32xf32>
    %13 = vector.broadcast %12 : vector<1x32xf32> to vector<128x32xf32>
    %14 = arith.addf %11, %13 : vector<128x32xf32>
    %cst_11 = arith.constant 0.000000e+00 : f32
    %15 = vector.broadcast %cst_11 : f32 to vector<128x32xf32>
    %16 = arith.maximumf %14, %15 : vector<128x32xf32>
    %c0_12 = arith.constant 0 : index
    %c0_13 = arith.constant 0 : index
    %17 = vector.load %arg6[%c0_12, %c0_13] : memref<32x4xf32, #tpu.memory_space<vmem>>, vector<32x4xf32>
    %cst_14 = arith.constant dense<0.000000e+00> : vector<128x4xf32>
    %18 = tpu.matmul %16, %17, %cst_14 {dimension_numbers = #tpu.dot_dimension_numbers<[1], [0], [0], [1], [0, 0, 1, 1], [], []>} : vector<128x32xf32>, vector<32x4xf32>, vector<128x4xf32> -> vector<128x4xf32>
    %c0_15 = arith.constant 0 : index
    %c0_16 = arith.constant 0 : index
    %19 = vector.load %arg7[%c0_15, %c0_16] : memref<1x4xf32, #tpu.memory_space<vmem>>, vector<1x4xf32>
    %20 = vector.broadcast %19 : vector<1x4xf32> to vector<128x4xf32>
    %21 = arith.addf %18, %20 : vector<128x4xf32>
    %22 = vector.extract_strided_slice %21 {offsets = [0, 0], sizes = [128, 2], strides = [1, 1]} : vector<128x4xf32> to vector<128x2xf32>
    %23 = vector.extract_strided_slice %21 {offsets = [0, 2], sizes = [128, 2], strides = [1, 1]} : vector<128x4xf32> to vector<128x2xf32>
    %cst_17 = arith.constant 5.000000e-01 : f32
    %24 = vector.broadcast %cst_17 : f32 to vector<128x2xf32>
    %25 = arith.mulf %24, %23 : vector<128x2xf32>
    %26 = math.exp %25 : vector<128x2xf32>
    %27 = arith.mulf %2, %26 : vector<128x2xf32>
    %28 = arith.addf %22, %27 : vector<128x2xf32>
    %c0_18 = arith.constant 0 : index
    %c0_19 = arith.constant 0 : index
    %29 = vector.load %arg8[%c0_18, %c0_19] : memref<2x32xf32, #tpu.memory_space<vmem>>, vector<2x32xf32>
    %cst_20 = arith.constant dense<0.000000e+00> : vector<128x32xf32>
    %30 = tpu.matmul %28, %29, %cst_20 {dimension_numbers = #tpu.dot_dimension_numbers<[1], [0], [0], [1], [0, 0, 1, 1], [], []>} : vector<128x2xf32>, vector<2x32xf32>, vector<128x32xf32> -> vector<128x32xf32>
    %c0_21 = arith.constant 0 : index
    %c0_22 = arith.constant 0 : index
    %31 = vector.load %arg9[%c0_21, %c0_22] : memref<1x32xf32, #tpu.memory_space<vmem>>, vector<1x32xf32>
    %32 = vector.broadcast %31 : vector<1x32xf32> to vector<128x32xf32>
    %33 = arith.addf %30, %32 : vector<128x32xf32>
    %cst_23 = arith.constant 0.000000e+00 : f32
    %34 = vector.broadcast %cst_23 : f32 to vector<128x32xf32>
    %35 = arith.maximumf %33, %34 : vector<128x32xf32>
    %c0_24 = arith.constant 0 : index
    %c0_25 = arith.constant 0 : index
    %36 = vector.load %arg10[%c0_24, %c0_25] : memref<32x64xf32, #tpu.memory_space<vmem>>, vector<32x64xf32>
    %cst_26 = arith.constant dense<0.000000e+00> : vector<128x64xf32>
    %37 = tpu.matmul %35, %36, %cst_26 {dimension_numbers = #tpu.dot_dimension_numbers<[1], [0], [0], [1], [0, 0, 1, 1], [], []>} : vector<128x32xf32>, vector<32x64xf32>, vector<128x64xf32> -> vector<128x64xf32>
    %c0_27 = arith.constant 0 : index
    %c0_28 = arith.constant 0 : index
    %38 = vector.load %arg11[%c0_27, %c0_28] : memref<1x64xf32, #tpu.memory_space<vmem>>, vector<1x64xf32>
    %39 = vector.broadcast %38 : vector<1x64xf32> to vector<128x64xf32>
    %40 = arith.addf %37, %39 : vector<128x64xf32>
    %cst_29 = arith.constant 0.000000e+00 : f32
    %41 = vector.broadcast %cst_29 : f32 to vector<128x64xf32>
    %42 = arith.maximumf %40, %41 : vector<128x64xf32>
    %c0_30 = arith.constant 0 : index
    %c0_31 = arith.constant 0 : index
    %43 = vector.load %arg12[%c0_30, %c0_31] : memref<64x11xf32, #tpu.memory_space<vmem>>, vector<64x11xf32>
    %cst_32 = arith.constant dense<0.000000e+00> : vector<128x11xf32>
    %44 = tpu.matmul %42, %43, %cst_32 {dimension_numbers = #tpu.dot_dimension_numbers<[1], [0], [0], [1], [0, 0, 1, 1], [], []>} : vector<128x64xf32>, vector<64x11xf32>, vector<128x11xf32> -> vector<128x11xf32>
    %c0_33 = arith.constant 0 : index
    %c0_34 = arith.constant 0 : index
    %45 = vector.load %arg13[%c0_33, %c0_34] : memref<1x11xf32, #tpu.memory_space<vmem>>, vector<1x11xf32>
    %46 = vector.broadcast %45 : vector<1x11xf32> to vector<128x11xf32>
    %47 = arith.addf %44, %46 : vector<128x11xf32>
    %48 = tpu.iota {dimensions = array<i32: 1>} : vector<128x11xi32>
    %c6_i32 = arith.constant 6 : i32
    %49 = vector.broadcast %c6_i32 : i32 to vector<128x11xi32>
    %50 = arith.cmpi sge, %48, %49 : vector<128x11xi32>
    %c11_i32 = arith.constant 11 : i32
    %51 = vector.broadcast %c11_i32 : i32 to vector<128x11xi32>
    %52 = arith.cmpi slt, %48, %51 : vector<128x11xi32>
    %53 = arith.andi %50, %52 : vector<128x11xi1>
    %cst_35 = arith.constant 0xFF800000 : f32
    %54 = vector.broadcast %cst_35 : f32 to vector<128x11xf32>
    %55 = arith.select %53, %47, %54 : vector<128x11xi1>, vector<128x11xf32>
    %cst_36 = arith.constant dense<0xFF800000> : vector<128xf32>
    %56 = vector.multi_reduction <maximumf>, %55, %cst_36 [1] : vector<128x11xf32> to vector<128xf32>
    %57 = vector.shape_cast %56 : vector<128xf32> to vector<128x1xf32>
    %58 = vector.broadcast %57 : vector<128x1xf32> to vector<128x11xf32>
    %59 = arith.subf %55, %58 : vector<128x11xf32>
    %60 = math.exp %59 : vector<128x11xf32>
    %cst_37 = arith.constant dense<0.000000e+00> : vector<128xf32>
    %61 = vector.multi_reduction <add>, %60, %cst_37 [1] : vector<128x11xf32> to vector<128xf32>
    %62 = vector.shape_cast %61 : vector<128xf32> to vector<128x1xf32>
    %63 = tpu.reciprocal %62 : vector<128x1xf32> -> vector<128x1xf32>
    %64 = vector.broadcast %63 : vector<128x1xf32> to vector<128x11xf32>
    %65 = arith.mulf %60, %64 : vector<128x11xf32>
    %66 = arith.select %53, %65, %47 : vector<128x11xi1>, vector<128x11xf32>
    %cst_38 = arith.constant 0.000000e+00 : f32
    %67 = vector.broadcast %cst_38 : f32 to vector<128x113xf32>
    %68 = tpu.concatenate %66, %21, %67 in 1 : vector<128x11xf32>, vector<128x4xf32>, vector<128x113xf32> -> vector<128x128xf32>
    %c0_39 = arith.constant 0 : index
    %c0_40 = arith.constant 0 : index
    %69 = vector.load %arg14[%c0_39, %c0_40] : memref<128x128xf32, #tpu.memory_space<vmem>>, vector<128x128xf32>
    tpu.vector_store %arg14[%c0_39, %c0_40], %68 {strides = array<i32>} : memref<128x128xf32, #tpu.memory_space<vmem>>, vector<128x128xf32>,
    return
  }
  func.func @transform_0(%arg0: i32) -> (i32, i32) {
    %c0_i32 = arith.constant 0 : i32
    %c0_i32_0 = arith.constant 0 : i32
    return %arg0, %c0_i32 : i32, i32
  }
  func.func @transform_1(%arg0: i32) -> (i32, i32) {
    %c0_i32 = arith.constant 0 : i32
    %c0_i32_0 = arith.constant 0 : i32
    %c0_i32_1 = arith.constant 0 : i32
    return %c0_i32, %c0_i32_0 : i32, i32
  }
  func.func @transform_2(%arg0: i32) -> (i32, i32) {
    %c0_i32 = arith.constant 0 : i32
    %c0_i32_0 = arith.constant 0 : i32
    %c0_i32_1 = arith.constant 0 : i32
    return %c0_i32, %c0_i32_0 : i32, i32
  }
  func.func @transform_3(%arg0: i32) -> (i32, i32) {
    %c0_i32 = arith.constant 0 : i32
    %c0_i32_0 = arith.constant 0 : i32
    %c0_i32_1 = arith.constant 0 : i32
    return %c0_i32, %c0_i32_0 : i32, i32
  }
  func.func @transform_4(%arg0: i32) -> (i32, i32) {
    %c0_i32 = arith.constant 0 : i32
    %c0_i32_0 = arith.constant 0 : i32
    %c0_i32_1 = arith.constant 0 : i32
    return %c0_i32, %c0_i32_0 : i32, i32
  }
  func.func @transform_5(%arg0: i32) -> (i32, i32) {
    %c0_i32 = arith.constant 0 : i32
    %c0_i32_0 = arith.constant 0 : i32
    %c0_i32_1 = arith.constant 0 : i32
    return %c0_i32, %c0_i32_0 : i32, i32
  }
  func.func @transform_6(%arg0: i32) -> (i32, i32) {
    %c0_i32 = arith.constant 0 : i32
    %c0_i32_0 = arith.constant 0 : i32
    %c0_i32_1 = arith.constant 0 : i32
    return %c0_i32, %c0_i32_0 : i32, i32
  }
  func.func @transform_7(%arg0: i32) -> (i32, i32) {
    %c0_i32 = arith.constant 0 : i32
    %c0_i32_0 = arith.constant 0 : i32
    %c0_i32_1 = arith.constant 0 : i32
    return %c0_i32, %c0_i32_0 : i32, i32
  }
  func.func @transform_8(%arg0: i32) -> (i32, i32) {
    %c0_i32 = arith.constant 0 : i32
    %c0_i32_0 = arith.constant 0 : i32
    %c0_i32_1 = arith.constant 0 : i32
    return %c0_i32, %c0_i32_0 : i32, i32
  }
  func.func @transform_9(%arg0: i32) -> (i32, i32) {
    %c0_i32 = arith.constant 0 : i32
    %c0_i32_0 = arith.constant 0 : i32
    %c0_i32_1 = arith.constant 0 : i32
    return %c0_i32, %c0_i32_0 : i32, i32
  }
  func.func @transform_10(%arg0: i32) -> (i32, i32) {
    %c0_i32 = arith.constant 0 : i32
    %c0_i32_0 = arith.constant 0 : i32
    %c0_i32_1 = arith.constant 0 : i32
    return %c0_i32, %c0_i32_0 : i32, i32
  }
  func.func @transform_11(%arg0: i32) -> (i32, i32) {
    %c0_i32 = arith.constant 0 : i32
    %c0_i32_0 = arith.constant 0 : i32
    %c0_i32_1 = arith.constant 0 : i32
    return %c0_i32, %c0_i32_0 : i32, i32
  }
  func.func @transform_12(%arg0: i32) -> (i32, i32) {
    %c0_i32 = arith.constant 0 : i32
    %c0_i32_0 = arith.constant 0 : i32
    %c0_i32_1 = arith.constant 0 : i32
    return %c0_i32, %c0_i32_0 : i32, i32
  }
  func.func @transform_13(%arg0: i32) -> (i32, i32) {
    %c0_i32 = arith.constant 0 : i32
    %c0_i32_0 = arith.constant 0 : i32
    return %arg0, %c0_i32 : i32, i32
  }
}

</mosaic_0001>

<llo_original>
// kernel: tpu_custom_call.1
$region0: #{tpu_custom_call.1}
  #allocation0 [shape = 'u32[]', space=smem, size = 0x4, offset = 0x4, fixed_abs, tag = 'smem constant byte address 0x4 - core index']
  #allocation1 [shape = 'u32[144,128]{1,0:T(1,128)}', space=vmem, size = 0x12000, scoped, tag = 'internal scratch']
  %s0 = inlined_call_operand.vmem [shape: f32[256,34], index: 0, kind: input, shape index: {}]
  %s1 = inlined_call_operand.vmem [shape: f32[32,64], index: 1, kind: input, shape index: {}]
  %s2 = inlined_call_operand.vmem [shape: f32[1,64], index: 2, kind: input, shape index: {}]
  %s3 = inlined_call_operand.vmem [shape: f32[64,32], index: 3, kind: input, shape index: {}]
  %s4 = inlined_call_operand.vmem [shape: f32[1,32], index: 4, kind: input, shape index: {}]
  %s5 = inlined_call_operand.vmem [shape: f32[32,4], index: 5, kind: input, shape index: {}]
  %s6 = inlined_call_operand.vmem [shape: f32[1,4], index: 6, kind: input, shape index: {}]
  %s7 = inlined_call_operand.vmem [shape: f32[2,32], index: 7, kind: input, shape index: {}]
  %s8 = inlined_call_operand.vmem [shape: f32[1,32], index: 8, kind: input, shape index: {}]
  %s9 = inlined_call_operand.vmem [shape: f32[32,64], index: 9, kind: input, shape index: {}]
  %s10 = inlined_call_operand.vmem [shape: f32[1,64], index: 10, kind: input, shape index: {}]
  %s11 = inlined_call_operand.vmem [shape: f32[64,11], index: 11, kind: input, shape index: {}]
  %s12 = inlined_call_operand.vmem [shape: f32[1,11], index: 12, kind: input, shape index: {}]
  %s13 = inlined_call_operand.hbm [shape: f32[256,128], index: 13, kind: output, shape index: {}]
  %s14 = sld [smem:[#allocation0]]
  $region85: #{tpu_custom_call.1} parent=0
    _
  %s16 = ssub.s32 1, %s14
  %s17 = scalar_select 0, %s16, %s14
  $region1: #{tpu_custom_call.1} parent=0
    #allocation2 [shape = 'u8[131072]{0}', space=vmem, size = 0x20000, scoped, tag = 'output window, operand 0']
    #allocation3 [shape = 's32[2]{0}', space=sflag, size = 0x8, scoped, tag = 'scoped memory for tpu_custom_call.1']
    %18 = vsyncpa [#allocation3], 0
    %s19 = scalar_lea.sflag [#allocation3], 1
    %20 = vsyncpa %s19, 0
    loop: start=0, step=1, limit=4
    $region2: #{tpu_custom_call.1} parent=1 // loop_pre_header
      _
    $region3: #{tpu_custom_call.1} parent=1 // loop_header
      %s22 = sphi 0, %s26
      %p23 = scmp.ge.s32.totalorder %s22, 4
      %s32 = sphi 0, %s34
      %s35 = sphi 0, %s32
      %s36 = sphi 0, %s35
      %s52 = sphi 0, %s36
      %s56 = sphi 0, %s56
      %s58 = sphi 0, %s56
      %s59 = sphi 0, %s58
      %s73 = sphi 0, %s59
      %s77 = sphi 0, %s77
      %s79 = sphi 0, %s77
      %s80 = sphi 0, %s79
      %s94 = sphi 0, %s80
      %s98 = sphi 0, %s98
      %s100 = sphi 0, %s98
      %s101 = sphi 0, %s100
      %s115 = sphi 0, %s101
      %s119 = sphi 0, %s119
      %s121 = sphi 0, %s119
      %s122 = sphi 0, %s121
      %s136 = sphi 0, %s122
      %s140 = sphi 0, %s140
      %s142 = sphi 0, %s140
      %s143 = sphi 0, %s142
      %s157 = sphi 0, %s143
      %s161 = sphi 0, %s161
      %s163 = sphi 0, %s161
      %s164 = sphi 0, %s163
      %s178 = sphi 0, %s164
      %s182 = sphi 0, %s182
      %s184 = sphi 0, %s182
      %s185 = sphi 0, %s184
      %s199 = sphi 0, %s185
      %s203 = sphi 0, %s203
      %s205 = sphi 0, %s203
      %s206 = sphi 0, %s205
      %s220 = sphi 0, %s206
      %s224 = sphi 0, %s224
      %s226 = sphi 0, %s224
      %s227 = sphi 0, %s226
      %s241 = sphi 0, %s227
      %s245 = sphi 0, %s245
      %s247 = sphi 0, %s245
      %s248 = sphi 0, %s247
      %s262 = sphi 0, %s248
      %s266 = sphi 0, %s266
      %s268 = sphi 0, %s266
      %s269 = sphi 0, %s268
      %s283 = sphi 0, %s269
      %s287 = sphi 0, %s287
      %s289 = sphi 0, %s287
      %s290 = sphi 0, %s289
      %s304 = sphi 0, %s290
      %s310 = sphi 0, %s312
      %s313 = sphi 0, %s310
      %s314 = sphi 0, %s313
      %s330 = sphi 0, %s314
    $region4: #{tpu_custom_call.1} parent=1 // loop_header_branch
      %25 = sbr.rel (%p23) target = $region8
    $region5: #{tpu_custom_call.1} parent=1 // loop_body
      %s27 = ssub.s32 %s22, 1
      %s28 = ssub.s32 %s22, 2
      %s29 = sadd.s32 %s22, 1
      %s30 = ssub.s32 %s22, %s29
      %p31 = scmp.eq.s32.totalorder %s30, 0
      %s33 = sadd.s32 %s32, 1
      %s34 = scalar_select %p31, %s32, %s33
      %p37 = pneg %p31
      %p38 = scmp.eq.s32.totalorder %s22, 1
      %p39 = por %p37, %p38
      %p40 = scmp.ne.s32.totalorder %s32, %s35
      %p41 = scmp.eq.s32.totalorder %s22, 0
      %p42 = por %p40, %p41
      %p43 = scmp.ne.s32.totalorder %s32, %s35
      %p44 = scmp.eq.s32.totalorder %s27, 1
      %p45 = por %p43, %p44
      %p46 = scmp.ne.s32.totalorder %s35, %s36
      %p47 = scmp.eq.s32.totalorder %s27, 0
      %p48 = por %p46, %p47
      %p49 = scmp.ne.s32.totalorder %s35, %s36
      %p50 = scmp.eq.s32.totalorder %s28, 1
      %p51 = por %p49, %p50
      %p53 = scmp.ne.s32.totalorder %s36, %s52
      %p54 = scmp.eq.s32.totalorder %s28, 0
      %p55 = por %p53, %p54
      %s57 = sadd.s32 %s56, 1
      %p60 = scmp.eq.s32.totalorder %s22, 1
      %p61 = scmp.ne.s32.totalorder %s56, %s58
      %p62 = scmp.eq.s32.totalorder %s22, 0
      %p63 = por %p61, %p62
      %p64 = scmp.ne.s32.totalorder %s56, %s58
      %p65 = scmp.eq.s32.totalorder %s27, 1
      %p66 = por %p64, %p65
      %p67 = scmp.ne.s32.totalorder %s58, %s59
      %p68 = scmp.eq.s32.totalorder %s27, 0
      %p69 = por %p67, %p68
      %p70 = scmp.ne.s32.totalorder %s58, %s59
      %p71 = scmp.eq.s32.totalorder %s28, 1
      %p72 = por %p70, %p71
      %p74 = scmp.ne.s32.totalorder %s59, %s73
      %p75 = scmp.eq.s32.totalorder %s28, 0
      %p76 = por %p74, %p75
      %s78 = sadd.s32 %s77, 1
      %p81 = scmp.eq.s32.totalorder %s22, 1
      %p82 = scmp.ne.s32.totalorder %s77, %s79
      %p83 = scmp.eq.s32.totalorder %s22, 0
      %p84 = por %p82, %p83
      %p85 = scmp.ne.s32.totalorder %s77, %s79
      %p86 = scmp.eq.s32.totalorder %s27, 1
      %p87 = por %p85, %p86
      %p88 = scmp.ne.s32.totalorder %s79, %s80
      %p89 = scmp.eq.s32.totalorder %s27, 0
      %p90 = por %p88, %p89
      %p91 = scmp.ne.s32.totalorder %s79, %s80
      %p92 = scmp.eq.s32.totalorder %s28, 1
      %p93 = por %p91, %p92
      %p95 = scmp.ne.s32.totalorder %s80, %s94
      %p96 = scmp.eq.s32.totalorder %s28, 0
      %p97 = por %p95, %p96
      %s99 = sadd.s32 %s98, 1
      %p102 = scmp.eq.s32.totalorder %s22, 1
      %p103 = scmp.ne.s32.totalorder %s98, %s100
      %p104 = scmp.eq.s32.totalorder %s22, 0
      %p105 = por %p103, %p104
      %p106 = scmp.ne.s32.totalorder %s98, %s100
      %p107 = scmp.eq.s32.totalorder %s27, 1
      %p108 = por %p106, %p107
      %p109 = scmp.ne.s32.totalorder %s100, %s101
      %p110 = scmp.eq.s32.totalorder %s27, 0
      %p111 = por %p109, %p110
      %p112 = scmp.ne.s32.totalorder %s100, %s101
      %p113 = scmp.eq.s32.totalorder %s28, 1
      %p114 = por %p112, %p113
      %p116 = scmp.ne.s32.totalorder %s101, %s115
      %p117 = scmp.eq.s32.totalorder %s28, 0
      %p118 = por %p116, %p117
      %s120 = sadd.s32 %s119, 1
      %p123 = scmp.eq.s32.totalorder %s22, 1
      %p124 = scmp.ne.s32.totalorder %s119, %s121
      %p125 = scmp.eq.s32.totalorder %s22, 0
      %p126 = por %p124, %p125
      %p127 = scmp.ne.s32.totalorder %s119, %s121
      %p128 = scmp.eq.s32.totalorder %s27, 1
      %p129 = por %p127, %p128
      %p130 = scmp.ne.s32.totalorder %s121, %s122
      %p131 = scmp.eq.s32.totalorder %s27, 0
      %p132 = por %p130, %p131
      %p133 = scmp.ne.s32.totalorder %s121, %s122
      %p134 = scmp.eq.s32.totalorder %s28, 1
      %p135 = por %p133, %p134
      %p137 = scmp.ne.s32.totalorder %s122, %s136
      %p138 = scmp.eq.s32.totalorder %s28, 0
      %p139 = por %p137, %p138
      %s141 = sadd.s32 %s140, 1
      %p144 = scmp.eq.s32.totalorder %s22, 1
      %p145 = scmp.ne.s32.totalorder %s140, %s142
      %p146 = scmp.eq.s32.totalorder %s22, 0
      %p147 = por %p145, %p146
      %p148 = scmp.ne.s32.totalorder %s140, %s142
      %p149 = scmp.eq.s32.totalorder %s27, 1
      %p150 = por %p148, %p149
      %p151 = scmp.ne.s32.totalorder %s142, %s143
      %p152 = scmp.eq.s32.totalorder %s27, 0
      %p153 = por %p151, %p152
      %p154 = scmp.ne.s32.totalorder %s142, %s143
      %p155 = scmp.eq.s32.totalorder %s28, 1
      %p156 = por %p154, %p155
      %p158 = scmp.ne.s32.totalorder %s143, %s157
      %p159 = scmp.eq.s32.totalorder %s28, 0
      %p160 = por %p158, %p159
      %s162 = sadd.s32 %s161, 1
      %p165 = scmp.eq.s32.totalorder %s22, 1
      %p166 = scmp.ne.s32.totalorder %s161, %s163
      %p167 = scmp.eq.s32.totalorder %s22, 0
      %p168 = por %p166, %p167
      %p169 = scmp.ne.s32.totalorder %s161, %s163
      %p170 = scmp.eq.s32.totalorder %s27, 1
      %p171 = por %p169, %p170
      %p172 = scmp.ne.s32.totalorder %s163, %s164
      %p173 = scmp.eq.s32.totalorder %s27, 0
      %p174 = por %p172, %p173
      %p175 = scmp.ne.s32.totalorder %s163, %s164
      %p176 = scmp.eq.s32.totalorder %s28, 1
      %p177 = por %p175, %p176
      %p179 = scmp.ne.s32.totalorder %s164, %s178
      %p180 = scmp.eq.s32.totalorder %s28, 0
      %p181 = por %p179, %p180
      %s183 = sadd.s32 %s182, 1
      %p186 = scmp.eq.s32.totalorder %s22, 1
      %p187 = scmp.ne.s32.totalorder %s182, %s184
      %p188 = scmp.eq.s32.totalorder %s22, 0
      %p189 = por %p187, %p188
      %p190 = scmp.ne.s32.totalorder %s182, %s184
      %p191 = scmp.eq.s32.totalorder %s27, 1
      %p192 = por %p190, %p191
      %p193 = scmp.ne.s32.totalorder %s184, %s185
      %p194 = scmp.eq.s32.totalorder %s27, 0
      %p195 = por %p193, %p194
      %p196 = scmp.ne.s32.totalorder %s184, %s185
      %p197 = scmp.eq.s32.totalorder %s28, 1
      %p198 = por %p196, %p197
      %p200 = scmp.ne.s32.totalorder %s185, %s199
      %p201 = scmp.eq.s32.totalorder %s28, 0
      %p202 = por %p200, %p201
      %s204 = sadd.s32 %s203, 1
      %p207 = scmp.eq.s32.totalorder %s22, 1
      %p208 = scmp.ne.s32.totalorder %s203, %s205
      %p209 = scmp.eq.s32.totalorder %s22, 0
      %p210 = por %p208, %p209
      %p211 = scmp.ne.s32.totalorder %s203, %s205
      %p212 = scmp.eq.s32.totalorder %s27, 1
      %p213 = por %p211, %p212
      %p214 = scmp.ne.s32.totalorder %s205, %s206
      %p215 = scmp.eq.s32.totalorder %s27, 0
      %p216 = por %p214, %p215
      %p217 = scmp.ne.s32.totalorder %s205, %s206
      %p218 = scmp.eq.s32.totalorder %s28, 1
      %p219 = por %p217, %p218
      %p221 = scmp.ne.s32.totalorder %s206, %s220
      %p222 = scmp.eq.s32.totalorder %s28, 0
      %p223 = por %p221, %p222
      %s225 = sadd.s32 %s224, 1
      %p228 = scmp.eq.s32.totalorder %s22, 1
      %p229 = scmp.ne.s32.totalorder %s224, %s226
      %p230 = scmp.eq.s32.totalorder %s22, 0
      %p231 = por %p229, %p230
      %p232 = scmp.ne.s32.totalorder %s224, %s226
      %p233 = scmp.eq.s32.totalorder %s27, 1
      %p234 = por %p232, %p233
      %p235 = scmp.ne.s32.totalorder %s226, %s227
      %p236 = scmp.eq.s32.totalorder %s27, 0
      %p237 = por %p235, %p236
      %p238 = scmp.ne.s32.totalorder %s226, %s227
      %p239 = scmp.eq.s32.totalorder %s28, 1
      %p240 = por %p238, %p239
      %p242 = scmp.ne.s32.totalorder %s227, %s241
      %p243 = scmp.eq.s32.totalorder %s28, 0
      %p244 = por %p242, %p243
      %s246 = sadd.s32 %s245, 1
      %p249 = scmp.eq.s32.totalorder %s22, 1
      %p250 = scmp.ne.s32.totalorder %s245, %s247
      %p251 = scmp.eq.s32.totalorder %s22, 0
      %p252 = por %p250, %p251
      %p253 = scmp.ne.s32.totalorder %s245, %s247
      %p254 = scmp.eq.s32.totalorder %s27, 1
      %p255 = por %p253, %p254
      %p256 = scmp.ne.s32.totalorder %s247, %s248
      %p257 = scmp.eq.s32.totalorder %s27, 0
      %p258 = por %p256, %p257
      %p259 = scmp.ne.s32.totalorder %s247, %s248
      %p260 = scmp.eq.s32.totalorder %s28, 1
      %p261 = por %p259, %p260
      %p263 = scmp.ne.s32.totalorder %s248, %s262
      %p264 = scmp.eq.s32.totalorder %s28, 0
      %p265 = por %p263, %p264
      %s267 = sadd.s32 %s266, 1
      %p270 = scmp.eq.s32.totalorder %s22, 1
      %p271 = scmp.ne.s32.totalorder %s266, %s268
      %p272 = scmp.eq.s32.totalorder %s22, 0
      %p273 = por %p271, %p272
      %p274 = scmp.ne.s32.totalorder %s266, %s268
      %p275 = scmp.eq.s32.totalorder %s27, 1
      %p276 = por %p274, %p275
      %p277 = scmp.ne.s32.totalorder %s268, %s269
      %p278 = scmp.eq.s32.totalorder %s27, 0
      %p279 = por %p277, %p278
      %p280 = scmp.ne.s32.totalorder %s268, %s269
      %p281 = scmp.eq.s32.totalorder %s28, 1
      %p282 = por %p280, %p281
      %p284 = scmp.ne.s32.totalorder %s269, %s283
      %p285 = scmp.eq.s32.totalorder %s28, 0
      %p286 = por %p284, %p285
      %s288 = sadd.s32 %s287, 1
      %p291 = scmp.eq.s32.totalorder %s22, 1
      %p292 = scmp.ne.s32.totalorder %s287, %s289
      %p293 = scmp.eq.s32.totalorder %s22, 0
      %p294 = por %p292, %p293
      %p295 = scmp.ne.s32.totalorder %s287, %s289
      %p296 = scmp.eq.s32.totalorder %s27, 1
      %p297 = por %p295, %p296
      %p298 = scmp.ne.s32.totalorder %s289, %s290
      %p299 = scmp.eq.s32.totalorder %s27, 0
      %p300 = por %p298, %p299
      %p301 = scmp.ne.s32.totalorder %s289, %s290
      %p302 = scmp.eq.s32.totalorder %s28, 1
      %p303 = por %p301, %p302
      %p305 = scmp.ne.s32.totalorder %s290, %s304
      %p306 = scmp.eq.s32.totalorder %s28, 0
      %p307 = por %p305, %p306
      %s308 = ssub.s32 %s22, %s29
      %p309 = scmp.eq.s32.totalorder %s308, 0
      %s311 = sadd.s32 %s310, 1
      %s312 = scalar_select %p309, %s310, %s311
      %p315 = pneg %p309
      %p316 = scmp.eq.s32.totalorder %s22, 1
      %p317 = por %p315, %p316
      %p318 = scmp.ne.s32.totalorder %s310, %s313
      %p319 = scmp.eq.s32.totalorder %s22, 0
      %p320 = por %p318, %p319
      %p321 = scmp.ne.s32.totalorder %s310, %s313
      %p322 = scmp.eq.s32.totalorder %s27, 1
      %p323 = por %p321, %p322
      %p324 = scmp.ne.s32.totalorder %s313, %s314
      %p325 = scmp.eq.s32.totalorder %s27, 0
      %p326 = por %p324, %p325
      %p327 = scmp.ne.s32.totalorder %s313, %s314
      %p328 = scmp.eq.s32.totalorder %s28, 1
      %p329 = por %p327, %p328
      %p331 = scmp.ne.s32.totalorder %s314, %s330
      %p332 = scmp.eq.s32.totalorder %s28, 0
      %p333 = por %p331, %p332
      %p334 = scmp.le.s32.totalorder 1, %s22
      %p335 = scmp.lt.s32.totalorder %s22, 3
      %p336 = pnand %p334, %p335
      %p337 = pneg %p336
      // Predicated region
      $region9: #{tpu_custom_call.1} parent=5 // pred_check
        _
      $region10: #{tpu_custom_call.1} parent=5 // pred_check_branch
        %339 = sbr.rel (%p336) target = $region12
      $region11: #{tpu_custom_call.1} parent=5 // pred_region
        %s340 = ssub.s32 %s22, 1
        // Predicated region
        $region13: #{tpu_custom_call.1} parent=11 // pred_check
          %p341 = pneg %p69
        $region14: #{tpu_custom_call.1} parent=11 // pred_check_branch
          %343 = sbr.rel (%p341) target = $region16
        $region15: #{tpu_custom_call.1} parent=11 // pred_region
          _
        $region16: #{tpu_custom_call.1} parent=11 // pred_fallthru
          _
        // Predicated region
        $region17: #{tpu_custom_call.1} parent=11 // pred_check
          %p344 = pneg %p90
        $region18: #{tpu_custom_call.1} parent=11 // pred_check_branch
          %346 = sbr.rel (%p344) target = $region20
        $region19: #{tpu_custom_call.1} parent=11 // pred_region
          _
        $region20: #{tpu_custom_call.1} parent=11 // pred_fallthru
          _
        // Predicated region
        $region21: #{tpu_custom_call.1} parent=11 // pred_check
          %p347 = pneg %p111
        $region22: #{tpu_custom_call.1} parent=11 // pred_check_branch
          %349 = sbr.rel (%p347) target = $region24
        $region23: #{tpu_custom_call.1} parent=11 // pred_region
          _
        $region24: #{tpu_custom_call.1} parent=11 // pred_fallthru
          _
        // Predicated region
        $region25: #{tpu_custom_call.1} parent=11 // pred_check
          %p350 = pneg %p132
        $region26: #{tpu_custom_call.1} parent=11 // pred_check_branch
          %352 = sbr.rel (%p350) target = $region28
        $region27: #{tpu_custom_call.1} parent=11 // pred_region
          _
        $region28: #{tpu_custom_call.1} parent=11 // pred_fallthru
          _
        // Predicated region
        $region29: #{tpu_custom_call.1} parent=11 // pred_check
          %p353 = pneg %p153
        $region30: #{tpu_custom_call.1} parent=11 // pred_check_branch
          %355 = sbr.rel (%p353) target = $region32
        $region31: #{tpu_custom_call.1} parent=11 // pred_region
          _
        $region32: #{tpu_custom_call.1} parent=11 // pred_fallthru
          _
        // Predicated region
        $region33: #{tpu_custom_call.1} parent=11 // pred_check
          %p356 = pneg %p174
        $region34: #{tpu_custom_call.1} parent=11 // pred_check_branch
          %358 = sbr.rel (%p356) target = $region36
        $region35: #{tpu_custom_call.1} parent=11 // pred_region
          _
        $region36: #{tpu_custom_call.1} parent=11 // pred_fallthru
          _
        // Predicated region
        $region37: #{tpu_custom_call.1} parent=11 // pred_check
          %p359 = pneg %p195
        $region38: #{tpu_custom_call.1} parent=11 // pred_check_branch
          %361 = sbr.rel (%p359) target = $region40
        $region39: #{tpu_custom_call.1} parent=11 // pred_region
          _
        $region40: #{tpu_custom_call.1} parent=11 // pred_fallthru
          _
        // Predicated region
        $region41: #{tpu_custom_call.1} parent=11 // pred_check
          %p362 = pneg %p216
        $region42: #{tpu_custom_call.1} parent=11 // pred_check_branch
          %364 = sbr.rel (%p362) target = $region44
        $region43: #{tpu_custom_call.1} parent=11 // pred_region
          _
        $region44: #{tpu_custom_call.1} parent=11 // pred_fallthru
          _
        // Predicated region
        $region45: #{tpu_custom_call.1} parent=11 // pred_check
          %p365 = pneg %p237
        $region46: #{tpu_custom_call.1} parent=11 // pred_check_branch
          %367 = sbr.rel (%p365) target = $region48
        $region47: #{tpu_custom_call.1} parent=11 // pred_region
          _
        $region48: #{tpu_custom_call.1} parent=11 // pred_fallthru
          _
        // Predicated region
        $region49: #{tpu_custom_call.1} parent=11 // pred_check
          %p368 = pneg %p258
        $region50: #{tpu_custom_call.1} parent=11 // pred_check_branch
          %370 = sbr.rel (%p368) target = $region52
        $region51: #{tpu_custom_call.1} parent=11 // pred_region
          _
        $region52: #{tpu_custom_call.1} parent=11 // pred_fallthru
          _
        // Predicated region
        $region53: #{tpu_custom_call.1} parent=11 // pred_check
          %p371 = pneg %p279
        $region54: #{tpu_custom_call.1} parent=11 // pred_check_branch
          %373 = sbr.rel (%p371) target = $region56
        $region55: #{tpu_custom_call.1} parent=11 // pred_region
          _
        $region56: #{tpu_custom_call.1} parent=11 // pred_fallthru
          _
        // Predicated region
        $region57: #{tpu_custom_call.1} parent=11 // pred_check
          %p374 = pneg %p300
        $region58: #{tpu_custom_call.1} parent=11 // pred_check_branch
          %376 = sbr.rel (%p374) target = $region60
        $region59: #{tpu_custom_call.1} parent=11 // pred_region
          _
        $region60: #{tpu_custom_call.1} parent=11 // pred_fallthru
          _
      $region12: #{tpu_custom_call.1} parent=5 // pred_fallthru
        _
      %p377 = scmp.lt.s32.totalorder %s22, 2
      // Predicated region
      $region61: #{tpu_custom_call.1} parent=5 // pred_check
        %p378 = pneg %p377
      $region62: #{tpu_custom_call.1} parent=5 // pred_check_branch
        %380 = sbr.rel (%p378) target = $region64
      $region63: #{tpu_custom_call.1} parent=5 // pred_region
        // Predicated region
        $region65: #{tpu_custom_call.1} parent=63 // pred_check
          %p381 = pneg %p42
        $region66: #{tpu_custom_call.1} parent=63 // pred_check_branch
          %383 = sbr.rel (%p381) target = $region68
        $region67: #{tpu_custom_call.1} parent=63 // pred_region
          %s384 = smul.u32 16, %s22
          %p385 = scmp.lt.s32.totalorder %s384, 31
          %s386 = scalar_select %p385, %s384, 31
          %s387 = smul.addr %s386, 8
          %s388 = scalar_lea.vmem %s0, %s387
          %s389 = smul.u32 16, %s22
        $region68: #{tpu_custom_call.1} parent=63 // pred_fallthru
          _
      $region64: #{tpu_custom_call.1} parent=5 // pred_fallthru
        _
      %p390 = scmp.le.s32.totalorder 1, %s22
      %p391 = scmp.lt.s32.totalorder %s22, 3
      %p392 = pnand %p390, %p391
      %p393 = pneg %p392
      // Predicated region
      $region69: #{tpu_custom_call.1} parent=5 // pred_check
        _
      $region70: #{tpu_custom_call.1} parent=5 // pred_check_branch
        %395 = sbr.rel (%p392) target = $region72
      $region71: #{tpu_custom_call.1} parent=5 // pred_region
        %s396 = ssub.s32 %s22, 1
        %s397 = smul.u32 16, %s27
        %p398 = scmp.lt.s32.totalorder %s397, 31
        %s399 = scalar_select %p398, %s397, 31
        %s400 = smul.addr %s399, 8
        %s401 = scalar_lea.vmem %s0, %s400
        %p402 = pneg %p48
        %p403 = pneg %p45
        %p404 = pneg %p69
        %p405 = pneg %p66
        %p406 = pneg %p90
        %p407 = pneg %p87
        %p408 = pneg %p111
        %p409 = pneg %p108
        %p410 = pneg %p132
        %p411 = pneg %p129
        %p412 = pneg %p153
        %p413 = pneg %p150
        %p414 = pneg %p174
        %p415 = pneg %p171
        %p416 = pneg %p195
        %p417 = pneg %p192
        %p418 = pneg %p216
        %p419 = pneg %p213
        %p420 = pneg %p237
        %p421 = pneg %p234
        %p422 = pneg %p258
        %p423 = pneg %p255
        %p424 = pneg %p279
        %p425 = pneg %p276
        %p426 = pneg %p300
        %p427 = pneg %p297
        %p428 = pneg %p326
        %p429 = pneg %p323
        %s430 = sand.u32 %s313, 1
        %s431 = scalar_lea.sflag [#allocation3], %s430
        %s432 = sand.u32 %s313, 1
        %s433 = smul.addr %s432, 128
        %s434 = scalar_lea.vmem [#allocation2], %s433
        %s435 = smul.u32 16, %s27
        %p436 = scmp.lt.s32.totalorder %s435, 31
        %s437 = scalar_select %p436, %s435, 31
        %s438 = smul.addr %s437, 8
        %s439 = scalar_lea.vmem %s0, %s438
        %s440 = smul.u32 16, %s27
        %s441 = smul.u32 16, %s27
        %v442 = vld [vmem:[%s439] sm:$0xff]
        %v443 = vld [vmem:[%s439 + $0x8] sm:$0xff]
        %v444 = vld [vmem:[%s439 + $0x10] sm:$0xff]
        %v445 = vld [vmem:[%s439 + $0x18] sm:$0xff]
        %v446 = vld [vmem:[%s439 + $0x20] sm:$0xff]
        %v447 = vld [vmem:[%s439 + $0x28] sm:$0xff]
        %v448 = vld [vmem:[%s439 + $0x30] sm:$0xff]
        %v449 = vld [vmem:[%s439 + $0x38] sm:$0xff]
        %v450 = vld [vmem:[%s439 + $0x40] sm:$0xff]
        %v451 = vld [vmem:[%s439 + $0x48] sm:$0xff]
        %v452 = vld [vmem:[%s439 + $0x50] sm:$0xff]
        %v453 = vld [vmem:[%s439 + $0x58] sm:$0xff]
        %v454 = vld [vmem:[%s439 + $0x60] sm:$0xff]
        %v455 = vld [vmem:[%s439 + $0x68] sm:$0xff]
        %v456 = vld [vmem:[%s439 + $0x70] sm:$0xff]
        %v457 = vld [vmem:[%s439 + $0x78] sm:$0xff]
        %v458 = vld [vmem:[%s1] sm:$0xff]
        %v459 = vld [vmem:[%s1 + $0x8] sm:$0xff]
        %v460 = vld [vmem:[%s1 + $0x10] sm:$0xff]
        %v461 = vld [vmem:[%s1 + $0x18] sm:$0xff]
        %v462 = vld [vmem:[%s2] sm:$0x1]
        %v464 = vlaneseq
        %v465 = vshrl.u32 %v464, 7
        %v466 = vsub.s32 0, %v465
        %v467 = vrot.slane %v462, %v466
        %vm469 = vcmask 261120
        %v471 = vsel %vm469, %v442, 0
        %v474 = vsel %vm469, %v443, 0
        %v477 = vsel %vm469, %v444, 0
        %v480 = vsel %vm469, %v445, 0
        %v483 = vsel %vm469, %v446, 0
        %v486 = vsel %vm469, %v447, 0
        %v489 = vsel %vm469, %v448, 0
        %v492 = vsel %vm469, %v449, 0
        %v495 = vsel %vm469, %v450, 0
        %v498 = vsel %vm469, %v451, 0
        %v501 = vsel %vm469, %v452, 0
        %v504 = vsel %vm469, %v453, 0
        %v507 = vsel %vm469, %v454, 0
        %v510 = vsel %vm469, %v455, 0
        %v513 = vsel %vm469, %v456, 0
        %v516 = vsel %vm469, %v457, 0
        %518 = vmatprep.subr.mxu0 0.0
        %519 = vmatpush1.msra.mxu0 %v458
        %520 = vmatprep.subr.mxu0 0.0
        %521 = vmatpush1.msra.mxu0 %v459
        %522 = vmatprep.subr.mxu0 0.0
        %523 = vmatpush1.msra.mxu0 %v460
        %524 = vmatprep.subr.mxu0 0.0
        %525 = vmatpush1.msra.mxu0 %v461
        %526 = vmatprep.subr.mxu0 0.0
        %527 = vmatpush1.msra.mxu0 0.0
        %528 = vmatprep.subr.mxu0 0.0
        %529 = vmatpush1.msra.mxu0 0.0
        %530 = vmatprep.subr.mxu0 0.0
        %531 = vmatpush1.msra.mxu0 0.0
        %532 = vmatprep.subr.mxu0 0.0
        %533 = vmatpush1.msra.mxu0 0.0
        %534 = vmatprep.subr.mxu0 0.0
        %535 = vmatpush1.msra.mxu0 0.0
        %536 = vmatprep.subr.mxu0 0.0
        %537 = vmatpush1.msra.mxu0 0.0
        %538 = vmatprep.subr.mxu0 0.0
        %539 = vmatpush1.msra.mxu0 0.0
        %540 = vmatprep.subr.mxu0 0.0
        %541 = vmatpush1.msra.mxu0 0.0
        %542 = vmatprep.subr.mxu0 0.0
        %543 = vmatpush1.msra.mxu0 0.0
        %544 = vmatprep.subr.mxu0 0.0
        %545 = vmatpush1.msra.mxu0 0.0
        %546 = vmatprep.subr.mxu0 0.0
        %547 = vmatpush1.msra.mxu0 0.0
        %548 = vmatprep.subr.mxu0 0.0
        %549 = vmatpush1.msra.mxu0 0.0
        %550 = vmatprep.subr.mxu0 0.0
        %551 = vmatpush1.msra.mxu0 0.0
        %552 = vmatprep.subr.mxu0 0.0
        %553 = vmatpush1.msra.mxu0 0.0
        %554 = vmatprep.subr.mxu0 0.0
        %555 = vmatpush1.msra.mxu0 0.0
        %556 = vmatprep.subr.mxu0 0.0
        %557 = vmatpush1.msra.mxu0 0.0
        %558 = vmatprep.subr.mxu0 0.0
        %559 = vmatpush1.msra.mxu0 0.0
        %560 = vmatprep.subr.mxu0 0.0
        %561 = vmatpush1.msra.mxu0 0.0
        %562 = vmatprep.subr.mxu0 0.0
        %563 = vmatpush1.msra.mxu0 0.0
        %564 = vmatprep.subr.mxu0 0.0
        %565 = vmatpush1.msra.mxu0 0.0
        %566 = vmatprep.subr.mxu0 0.0
        %567 = vmatpush1.msra.mxu0 0.0
        %568 = vmatprep.subr.mxu0 0.0
        %569 = vmatpush1.msra.mxu0 0.0
        %570 = vmatprep.subr.mxu0 0.0
        %571 = vmatpush1.msra.mxu0 0.0
        %572 = vmatprep.subr.mxu0 0.0
        %573 = vmatpush1.msra.mxu0 0.0
        %574 = vmatprep.subr.mxu0 0.0
        %575 = vmatpush1.msra.mxu0 0.0
        %576 = vmatprep.subr.mxu0 0.0
        %577 = vmatpush1.msra.mxu0 0.0
        %578 = vmatprep.subr.mxu0 0.0
        %579 = vmatpush1.msra.mxu0 0.0
        %580 = vmatprep.subr.mxu0 0.0
        %581 = vmatpush1.msra.mxu0 0.0
        %582 = vmatprep.mubr.f32.mxu0 0.0
        %583 = vmatmul.mubr.f32.gmra.mrb[0].mxu0 %v471
        %v584 = vpop.f32.mrb[0].mxu0
        %v585 = vadd.f32 %v467, %v584
        %v586 = vpop.f32.mrb[0].mxu0
        %587 = vmatprep.mubr.f32.mxu0 0.0
        %588 = vmatmul.mubr.f32.gmra.mrb[0].mxu0 %v474
        %v589 = vpop.f32.mrb[0].mxu0
        %v590 = vadd.f32 %v467, %v589
        %v591 = vpop.f32.mrb[0].mxu0
        %592 = vmatprep.mubr.f32.mxu0 0.0
        %593 = vmatmul.mubr.f32.gmra.mrb[0].mxu0 %v477
        %v594 = vpop.f32.mrb[0].mxu0
        %v595 = vadd.f32 %v467, %v594
        %v596 = vpop.f32.mrb[0].mxu0
        %597 = vmatprep.mubr.f32.mxu0 0.0
        %598 = vmatmul.mubr.f32.gmra.mrb[0].mxu0 %v480
        %v599 = vpop.f32.mrb[0].mxu0
        %v600 = vadd.f32 %v467, %v599
        %v601 = vpop.f32.mrb[0].mxu0
        %602 = vmatprep.mubr.f32.mxu0 0.0
        %603 = vmatmul.mubr.f32.gmra.mrb[0].mxu0 %v483
        %v604 = vpop.f32.mrb[0].mxu0
        %v605 = vadd.f32 %v467, %v604
        %v606 = vpop.f32.mrb[0].mxu0
        %607 = vmatprep.mubr.f32.mxu0 0.0
        %608 = vmatmul.mubr.f32.gmra.mrb[0].mxu0 %v486
        %v609 = vpop.f32.mrb[0].mxu0
        %v610 = vadd.f32 %v467, %v609
        %v611 = vpop.f32.mrb[0].mxu0
        %612 = vmatprep.mubr.f32.mxu0 0.0
        %613 = vmatmul.mubr.f32.gmra.mrb[0].mxu0 %v489
        %v614 = vpop.f32.mrb[0].mxu0
        %v615 = vadd.f32 %v467, %v614
        %v616 = vpop.f32.mrb[0].mxu0
        %617 = vmatprep.mubr.f32.mxu0 0.0
        %618 = vmatmul.mubr.f32.gmra.mrb[0].mxu0 %v492
        %v619 = vpop.f32.mrb[0].mxu0
        %v620 = vadd.f32 %v467, %v619
        %v621 = vpop.f32.mrb[0].mxu0
        %622 = vmatprep.mubr.f32.mxu0 0.0
        %623 = vmatmul.mubr.f32.gmra.mrb[0].mxu0 %v495
        %v624 = vpop.f32.mrb[0].mxu0
        %v625 = vadd.f32 %v467, %v624
        %v626 = vpop.f32.mrb[0].mxu0
        %627 = vmatprep.mubr.f32.mxu0 0.0
        %628 = vmatmul.mubr.f32.gmra.mrb[0].mxu0 %v498
        %v629 = vpop.f32.mrb[0].mxu0
        %v630 = vadd.f32 %v467, %v629
        %v631 = vpop.f32.mrb[0].mxu0
        %632 = vmatprep.mubr.f32.mxu0 0.0
        %633 = vmatmul.mubr.f32.gmra.mrb[0].mxu0 %v501
        %v634 = vpop.f32.mrb[0].mxu0
        %v635 = vadd.f32 %v467, %v634
        %v636 = vpop.f32.mrb[0].mxu0
        %637 = vmatprep.mubr.f32.mxu0 0.0
        %638 = vmatmul.mubr.f32.gmra.mrb[0].mxu0 %v504
        %v639 = vpop.f32.mrb[0].mxu0
        %v640 = vadd.f32 %v467, %v639
        %v641 = vpop.f32.mrb[0].mxu0
        %642 = vmatprep.mubr.f32.mxu0 0.0
        %643 = vmatmul.mubr.f32.gmra.mrb[0].mxu0 %v507
        %v644 = vpop.f32.mrb[0].mxu0
        %v645 = vadd.f32 %v467, %v644
        %v646 = vpop.f32.mrb[0].mxu0
        %647 = vmatprep.mubr.f32.mxu0 0.0
        %648 = vmatmul.mubr.f32.gmra.mrb[0].mxu0 %v510
        %v649 = vpop.f32.mrb[0].mxu0
        %v650 = vadd.f32 %v467, %v649
        %v651 = vpop.f32.mrb[0].mxu0
        %652 = vmatprep.mubr.f32.mxu0 0.0
        %653 = vmatmul.mubr.f32.gmra.mrb[0].mxu0 %v513
        %v654 = vpop.f32.mrb[0].mxu0
        %v655 = vadd.f32 %v467, %v654
        %v656 = vpop.f32.mrb[0].mxu0
        %657 = vmatprep.mubr.f32.mxu0 0.0
        %658 = vmatmul.mubr.f32.gmra.mrb[0].mxu0 %v516
        %v659 = vpop.f32.mrb[0].mxu0
        %v660 = vadd.f32 %v467, %v659
        %v661 = vpop.f32.mrb[0].mxu0
        %662 = vdwg.mxu0
        %v663 = vmax.f32 %v585, 0.0
        %v664 = vmax.f32 %v590, 0.0
        %v665 = vmax.f32 %v595, 0.0
        %v666 = vmax.f32 %v600, 0.0
        %v667 = vmax.f32 %v605, 0.0
        %v668 = vmax.f32 %v610, 0.0
        %v669 = vmax.f32 %v615, 0.0
        %v670 = vmax.f32 %v620, 0.0
        %v671 = vmax.f32 %v625, 0.0
        %v672 = vmax.f32 %v630, 0.0
        %v673 = vmax.f32 %v635, 0.0
        %v674 = vmax.f32 %v640, 0.0
        %v675 = vmax.f32 %v645, 0.0
        %v676 = vmax.f32 %v650, 0.0
        %v677 = vmax.f32 %v655, 0.0
        %v678 = vmax.f32 %v660, 0.0
        %v679 = vld [vmem:[%s3] sm:$0xff]
        %v680 = vld [vmem:[%s3 + $0x8] sm:$0xff]
        %v681 = vld [vmem:[%s3 + $0x10] sm:$0xff]
        %v682 = vld [vmem:[%s3 + $0x18] sm:$0xff]
        %v683 = vld [vmem:[%s3 + $0x20] sm:$0xff]
        %v684 = vld [vmem:[%s3 + $0x28] sm:$0xff]
        %v685 = vld [vmem:[%s3 + $0x30] sm:$0xff]
        %v686 = vld [vmem:[%s3 + $0x38] sm:$0xff]
        %v687 = vld [vmem:[%s4] sm:$0x1]
        %v689 = vlaneseq
        %v690 = vshrl.u32 %v689, 7
        %v691 = vsub.s32 0, %v690
        %v692 = vrot.slane %v687, %v691
        %vm694 = vcmask 523264
        %v696 = vsel %vm694, %v663, 0
        %v699 = vsel %vm694, %v664, 0
        %v702 = vsel %vm694, %v665, 0
        %v705 = vsel %vm694, %v666, 0
        %v708 = vsel %vm694, %v667, 0
        %v711 = vsel %vm694, %v668, 0
        %v714 = vsel %vm694, %v669, 0
        %v717 = vsel %vm694, %v670, 0
        %v720 = vsel %vm694, %v671, 0
        %v723 = vsel %vm694, %v672, 0
        %v726 = vsel %vm694, %v673, 0
        %v729 = vsel %vm694, %v674, 0
        %v732 = vsel %vm694, %v675, 0
        %v735 = vsel %vm694, %v676, 0
        %v738 = vsel %vm694, %v677, 0
        %v741 = vsel %vm694, %v678, 0
        %743 = vmatprep.subr.mxu0 0.0
        %744 = vmatpush1.msra.mxu0 %v679
        %745 = vmatprep.subr.mxu0 0.0
        %746 = vmatpush1.msra.mxu0 %v680
        %747 = vmatprep.subr.mxu0 0.0
        %748 = vmatpush1.msra.mxu0 %v681
        %749 = vmatprep.subr.mxu0 0.0
        %750 = vmatpush1.msra.mxu0 %v682
        %751 = vmatprep.subr.mxu0 0.0
        %752 = vmatpush1.msra.mxu0 %v683
        %753 = vmatprep.subr.mxu0 0.0
        %754 = vmatpush1.msra.mxu0 %v684
        %755 = vmatprep.subr.mxu0 0.0
        %756 = vmatpush1.msra.mxu0 %v685
        %757 = vmatprep.subr.mxu0 0.0
        %758 = vmatpush1.msra.mxu0 %v686
        %759 = vmatprep.subr.mxu0 0.0
        %760 = vmatpush1.msra.mxu0 0.0
        %761 = vmatprep.subr.mxu0 0.0
        %762 = vmatpush1.msra.mxu0 0.0
        %763 = vmatprep.subr.mxu0 0.0
        %764 = vmatpush1.msra.mxu0 0.0
        %765 = vmatprep.subr.mxu0 0.0
        %766 = vmatpush1.msra.mxu0 0.0
        %767 = vmatprep.subr.mxu0 0.0
        %768 = vmatpush1.msra.mxu0 0.0
        %769 = vmatprep.subr.mxu0 0.0
        %770 = vmatpush1.msra.mxu0 0.0
        %771 = vmatprep.subr.mxu0 0.0
        %772 = vmatpush1.msra.mxu0 0.0
        %773 = vmatprep.subr.mxu0 0.0
        %774 = vmatpush1.msra.mxu0 0.0
        %775 = vmatprep.subr.mxu0 0.0
        %776 = vmatpush1.msra.mxu0 0.0
        %777 = vmatprep.subr.mxu0 0.0
        %778 = vmatpush1.msra.mxu0 0.0
        %779 = vmatprep.subr.mxu0 0.0
        %780 = vmatpush1.msra.mxu0 0.0
        %781 = vmatprep.subr.mxu0 0.0
        %782 = vmatpush1.msra.mxu0 0.0
        %783 = vmatprep.subr.mxu0 0.0
        %784 = vmatpush1.msra.mxu0 0.0
        %785 = vmatprep.subr.mxu0 0.0
        %786 = vmatpush1.msra.mxu0 0.0
        %787 = vmatprep.subr.mxu0 0.0
        %788 = vmatpush1.msra.mxu0 0.0
        %789 = vmatprep.subr.mxu0 0.0
        %790 = vmatpush1.msra.mxu0 0.0
        %791 = vmatprep.subr.mxu0 0.0
        %792 = vmatpush1.msra.mxu0 0.0
        %793 = vmatprep.subr.mxu0 0.0
        %794 = vmatpush1.msra.mxu0 0.0
        %795 = vmatprep.subr.mxu0 0.0
        %796 = vmatpush1.msra.mxu0 0.0
        %797 = vmatprep.subr.mxu0 0.0
        %798 = vmatpush1.msra.mxu0 0.0
        %799 = vmatprep.subr.mxu0 0.0
        %800 = vmatpush1.msra.mxu0 0.0
        %801 = vmatprep.subr.mxu0 0.0
        %802 = vmatpush1.msra.mxu0 0.0
        %803 = vmatprep.subr.mxu0 0.0
        %804 = vmatpush1.msra.mxu0 0.0
        %805 = vmatprep.subr.mxu0 0.0
        %806 = vmatpush1.msra.mxu0 0.0
        %807 = vmatprep.mubr.f32.mxu0 0.0
        %808 = vmatmul.mubr.f32.gmra.mrb[0].mxu0 %v696
        %v809 = vpop.f32.mrb[0].mxu0
        %v810 = vadd.f32 %v692, %v809
        %v811 = vpop.f32.mrb[0].mxu0
        %812 = vmatprep.mubr.f32.mxu0 0.0
        %813 = vmatmul.mubr.f32.gmra.mrb[0].mxu0 %v699
        %v814 = vpop.f32.mrb[0].mxu0
        %v815 = vadd.f32 %v692, %v814
        %v816 = vpop.f32.mrb[0].mxu0
        %817 = vmatprep.mubr.f32.mxu0 0.0
        %818 = vmatmul.mubr.f32.gmra.mrb[0].mxu0 %v702
        %v819 = vpop.f32.mrb[0].mxu0
        %v820 = vadd.f32 %v692, %v819
        %v821 = vpop.f32.mrb[0].mxu0
        %822 = vmatprep.mubr.f32.mxu0 0.0
        %823 = vmatmul.mubr.f32.gmra.mrb[0].mxu0 %v705
        %v824 = vpop.f32.mrb[0].mxu0
        %v825 = vadd.f32 %v692, %v824
        %v826 = vpop.f32.mrb[0].mxu0
        %827 = vmatprep.mubr.f32.mxu0 0.0
        %828 = vmatmul.mubr.f32.gmra.mrb[0].mxu0 %v708
        %v829 = vpop.f32.mrb[0].mxu0
        %v830 = vadd.f32 %v692, %v829
        %v831 = vpop.f32.mrb[0].mxu0
        %832 = vmatprep.mubr.f32.mxu0 0.0
        %833 = vmatmul.mubr.f32.gmra.mrb[0].mxu0 %v711
        %v834 = vpop.f32.mrb[0].mxu0
        %v835 = vadd.f32 %v692, %v834
        %v836 = vpop.f32.mrb[0].mxu0
        %837 = vmatprep.mubr.f32.mxu0 0.0
        %838 = vmatmul.mubr.f32.gmra.mrb[0].mxu0 %v714
        %v839 = vpop.f32.mrb[0].mxu0
        %v840 = vadd.f32 %v692, %v839
        %v841 = vpop.f32.mrb[0].mxu0
        %842 = vmatprep.mubr.f32.mxu0 0.0
        %843 = vmatmul.mubr.f32.gmra.mrb[0].mxu0 %v717
        %v844 = vpop.f32.mrb[0].mxu0
        %v845 = vadd.f32 %v692, %v844
        %v846 = vpop.f32.mrb[0].mxu0
        %847 = vmatprep.mubr.f32.mxu0 0.0
        %848 = vmatmul.mubr.f32.gmra.mrb[0].mxu0 %v720
        %v849 = vpop.f32.mrb[0].mxu0
        %v850 = vadd.f32 %v692, %v849
        %v851 = vpop.f32.mrb[0].mxu0
        %852 = vmatprep.mubr.f32.mxu0 0.0
        %853 = vmatmul.mubr.f32.gmra.mrb[0].mxu0 %v723
        %v854 = vpop.f32.mrb[0].mxu0
        %v855 = vadd.f32 %v692, %v854
        %v856 = vpop.f32.mrb[0].mxu0
        %857 = vmatprep.mubr.f32.mxu0 0.0
        %858 = vmatmul.mubr.f32.gmra.mrb[0].mxu0 %v726
        %v859 = vpop.f32.mrb[0].mxu0
        %v860 = vadd.f32 %v692, %v859
        %v861 = vpop.f32.mrb[0].mxu0
        %862 = vmatprep.mubr.f32.mxu0 0.0
        %863 = vmatmul.mubr.f32.gmra.mrb[0].mxu0 %v729
        %v864 = vpop.f32.mrb[0].mxu0
        %v865 = vadd.f32 %v692, %v864
        %v866 = vpop.f32.mrb[0].mxu0
        %867 = vmatprep.mubr.f32.mxu0 0.0
        %868 = vmatmul.mubr.f32.gmra.mrb[0].mxu0 %v732
        %v869 = vpop.f32.mrb[0].mxu0
        %v870 = vadd.f32 %v692, %v869
        %v871 = vpop.f32.mrb[0].mxu0
        %872 = vmatprep.mubr.f32.mxu0 0.0
        %873 = vmatmul.mubr.f32.gmra.mrb[0].mxu0 %v735
        %v874 = vpop.f32.mrb[0].mxu0
        %v875 = vadd.f32 %v692, %v874
        %v876 = vpop.f32.mrb[0].mxu0
        %877 = vmatprep.mubr.f32.mxu0 0.0
        %878 = vmatmul.mubr.f32.gmra.mrb[0].mxu0 %v738
        %v879 = vpop.f32.mrb[0].mxu0
        %v880 = vadd.f32 %v692, %v879
        %v881 = vpop.f32.mrb[0].mxu0
        %882 = vmatprep.mubr.f32.mxu0 0.0
        %883 = vmatmul.mubr.f32.gmra.mrb[0].mxu0 %v741
        %v884 = vpop.f32.mrb[0].mxu0
        %v885 = vadd.f32 %v692, %v884
        %v886 = vpop.f32.mrb[0].mxu0
        %887 = vdwg.mxu0
        %v888 = vmax.f32 %v810, 0.0
        %v889 = vmax.f32 %v815, 0.0
        %v890 = vmax.f32 %v820, 0.0
        %v891 = vmax.f32 %v825, 0.0
        %v892 = vmax.f32 %v830, 0.0
        %v893 = vmax.f32 %v835, 0.0
        %v894 = vmax.f32 %v840, 0.0
        %v895 = vmax.f32 %v845, 0.0
        %v896 = vmax.f32 %v850, 0.0
        %v897 = vmax.f32 %v855, 0.0
        %v898 = vmax.f32 %v860, 0.0
        %v899 = vmax.f32 %v865, 0.0
        %v900 = vmax.f32 %v870, 0.0
        %v901 = vmax.f32 %v875, 0.0
        %v902 = vmax.f32 %v880, 0.0
        %v903 = vmax.f32 %v885, 0.0
        %v904 = vld [vmem:[%s5] sm:$0xff]
        %v905 = vld [vmem:[%s5 + $0x8] sm:$0xff]
        %v906 = vld [vmem:[%s5 + $0x10] sm:$0xff]
        %v907 = vld [vmem:[%s5 + $0x18] sm:$0xff]
        %v908 = vld [vmem:[%s6] sm:$0x1]
        %v910 = vlaneseq
        %v911 = vshrl.u32 %v910, 7
        %v912 = vsub.s32 0, %v911
        %v913 = vrot.slane %v908, %v912
        %v916 = vsel %vm469, %v888, 0
        %v919 = vsel %vm469, %v889, 0
        %v922 = vsel %vm469, %v890, 0
        %v925 = vsel %vm469, %v891, 0
        %v928 = vsel %vm469, %v892, 0
        %v931 = vsel %vm469, %v893, 0
        %v934 = vsel %vm469, %v894, 0
        %v937 = vsel %vm469, %v895, 0
        %v940 = vsel %vm469, %v896, 0
        %v943 = vsel %vm469, %v897, 0
        %v946 = vsel %vm469, %v898, 0
        %v949 = vsel %vm469, %v899, 0
        %v952 = vsel %vm469, %v900, 0
        %v955 = vsel %vm469, %v901, 0
        %v958 = vsel %vm469, %v902, 0
        %v961 = vsel %vm469, %v903, 0
        %963 = vmatprep.subr.mxu0 0.0
        %964 = vmatpush1.msra.mxu0 %v904
        %965 = vmatprep.subr.mxu0 0.0
        %966 = vmatpush1.msra.mxu0 %v905
        %967 = vmatprep.subr.mxu0 0.0
        %968 = vmatpush1.msra.mxu0 %v906
        %969 = vmatprep.subr.mxu0 0.0
        %970 = vmatpush1.msra.mxu0 %v907
        %971 = vmatprep.subr.mxu0 0.0
        %972 = vmatpush1.msra.mxu0 0.0
        %973 = vmatprep.subr.mxu0 0.0
        %974 = vmatpush1.msra.mxu0 0.0
        %975 = vmatprep.subr.mxu0 0.0
        %976 = vmatpush1.msra.mxu0 0.0
        %977 = vmatprep.subr.mxu0 0.0
        %978 = vmatpush1.msra.mxu0 0.0
        %979 = vmatprep.subr.mxu0 0.0
        %980 = vmatpush1.msra.mxu0 0.0
        %981 = vmatprep.subr.mxu0 0.0
        %982 = vmatpush1.msra.mxu0 0.0
        %983 = vmatprep.subr.mxu0 0.0
        %984 = vmatpush1.msra.mxu0 0.0
        %985 = vmatprep.subr.mxu0 0.0
        %986 = vmatpush1.msra.mxu0 0.0
        %987 = vmatprep.subr.mxu0 0.0
        %988 = vmatpush1.msra.mxu0 0.0
        %989 = vmatprep.subr.mxu0 0.0
        %990 = vmatpush1.msra.mxu0 0.0
        %991 = vmatprep.subr.mxu0 0.0
        %992 = vmatpush1.msra.mxu0 0.0
        %993 = vmatprep.subr.mxu0 0.0
        %994 = vmatpush1.msra.mxu0 0.0
        %995 = vmatprep.subr.mxu0 0.0
        %996 = vmatpush1.msra.mxu0 0.0
        %997 = vmatprep.subr.mxu0 0.0
        %998 = vmatpush1.msra.mxu0 0.0
        %999 = vmatprep.subr.mxu0 0.0
        %1000 = vmatpush1.msra.mxu0 0.0
        %1001 = vmatprep.subr.mxu0 0.0
        %1002 = vmatpush1.msra.mxu0 0.0
        %1003 = vmatprep.subr.mxu0 0.0
        %1004 = vmatpush1.msra.mxu0 0.0
        %1005 = vmatprep.subr.mxu0 0.0
        %1006 = vmatpush1.msra.mxu0 0.0
        %1007 = vmatprep.subr.mxu0 0.0
        %1008 = vmatpush1.msra.mxu0 0.0
        %1009 = vmatprep.subr.mxu0 0.0
        %1010 = vmatpush1.msra.mxu0 0.0
        %1011 = vmatprep.subr.mxu0 0.0
        %1012 = vmatpush1.msra.mxu0 0.0
        %1013 = vmatprep.subr.mxu0 0.0
        %1014 = vmatpush1.msra.mxu0 0.0
        %1015 = vmatprep.subr.mxu0 0.0
        %1016 = vmatpush1.msra.mxu0 0.0
        %1017 = vmatprep.subr.mxu0 0.0
        %1018 = vmatpush1.msra.mxu0 0.0
        %1019 = vmatprep.subr.mxu0 0.0
        %1020 = vmatpush1.msra.mxu0 0.0
        %1021 = vmatprep.subr.mxu0 0.0
        %1022 = vmatpush1.msra.mxu0 0.0
        %1023 = vmatprep.subr.mxu0 0.0
        %1024 = vmatpush1.msra.mxu0 0.0
        %1025 = vmatprep.subr.mxu0 0.0
        %1026 = vmatpush1.msra.mxu0 0.0
        %1027 = vmatprep.mubr.f32.mxu0 0.0
        %1028 = vmatmul.mubr.f32.gmra.mrb[0].mxu0 %v916
        %v1029 = vpop.f32.mrb[0].mxu0
        %v1030 = vadd.f32 %v913, %v1029
        %v1031 = vpop.f32.mrb[0].mxu0
        %1032 = vmatprep.mubr.f32.mxu0 0.0
        %1033 = vmatmul.mubr.f32.gmra.mrb[0].mxu0 %v919
        %v1034 = vpop.f32.mrb[0].mxu0
        %v1035 = vadd.f32 %v913, %v1034
        %v1036 = vpop.f32.mrb[0].mxu0
        %1037 = vmatprep.mubr.f32.mxu0 0.0
        %1038 = vmatmul.mubr.f32.gmra.mrb[0].mxu0 %v922
        %v1039 = vpop.f32.mrb[0].mxu0
        %v1040 = vadd.f32 %v913, %v1039
        %v1041 = vpop.f32.mrb[0].mxu0
        %1042 = vmatprep.mubr.f32.mxu0 0.0
        %1043 = vmatmul.mubr.f32.gmra.mrb[0].mxu0 %v925
        %v1044 = vpop.f32.mrb[0].mxu0
        %v1045 = vadd.f32 %v913, %v1044
        %v1046 = vpop.f32.mrb[0].mxu0
        %1047 = vmatprep.mubr.f32.mxu0 0.0
        %1048 = vmatmul.mubr.f32.gmra.mrb[0].mxu0 %v928
        %v1049 = vpop.f32.mrb[0].mxu0
        %v1050 = vadd.f32 %v913, %v1049
        %v1051 = vpop.f32.mrb[0].mxu0
        %1052 = vmatprep.mubr.f32.mxu0 0.0
        %1053 = vmatmul.mubr.f32.gmra.mrb[0].mxu0 %v931
        %v1054 = vpop.f32.mrb[0].mxu0
        %v1055 = vadd.f32 %v913, %v1054
        %v1056 = vpop.f32.mrb[0].mxu0
        %1057 = vmatprep.mubr.f32.mxu0 0.0
        %1058 = vmatmul.mubr.f32.gmra.mrb[0].mxu0 %v934
        %v1059 = vpop.f32.mrb[0].mxu0
        %v1060 = vadd.f32 %v913, %v1059
        %v1061 = vpop.f32.mrb[0].mxu0
        %1062 = vmatprep.mubr.f32.mxu0 0.0
        %1063 = vmatmul.mubr.f32.gmra.mrb[0].mxu0 %v937
        %v1064 = vpop.f32.mrb[0].mxu0
        %v1065 = vadd.f32 %v913, %v1064
        %v1066 = vpop.f32.mrb[0].mxu0
        %1067 = vmatprep.mubr.f32.mxu0 0.0
        %1068 = vmatmul.mubr.f32.gmra.mrb[0].mxu0 %v940
        %v1069 = vpop.f32.mrb[0].mxu0
        %v1070 = vadd.f32 %v913, %v1069
        %v1071 = vpop.f32.mrb[0].mxu0
        %1072 = vmatprep.mubr.f32.mxu0 0.0
        %1073 = vmatmul.mubr.f32.gmra.mrb[0].mxu0 %v943
        %v1074 = vpop.f32.mrb[0].mxu0
        %v1075 = vadd.f32 %v913, %v1074
        %v1076 = vpop.f32.mrb[0].mxu0
        %1077 = vmatprep.mubr.f32.mxu0 0.0
        %1078 = vmatmul.mubr.f32.gmra.mrb[0].mxu0 %v946
        %v1079 = vpop.f32.mrb[0].mxu0
        %v1080 = vadd.f32 %v913, %v1079
        %v1081 = vpop.f32.mrb[0].mxu0
        %1082 = vmatprep.mubr.f32.mxu0 0.0
        %1083 = vmatmul.mubr.f32.gmra.mrb[0].mxu0 %v949
        %v1084 = vpop.f32.mrb[0].mxu0
        %v1085 = vadd.f32 %v913, %v1084
        %v1086 = vpop.f32.mrb[0].mxu0
        %1087 = vmatprep.mubr.f32.mxu0 0.0
        %1088 = vmatmul.mubr.f32.gmra.mrb[0].mxu0 %v952
        %v1089 = vpop.f32.mrb[0].mxu0
        %v1090 = vadd.f32 %v913, %v1089
        %v1091 = vpop.f32.mrb[0].mxu0
        %1092 = vmatprep.mubr.f32.mxu0 0.0
        %1093 = vmatmul.mubr.f32.gmra.mrb[0].mxu0 %v955
        %v1094 = vpop.f32.mrb[0].mxu0
        %v1095 = vadd.f32 %v913, %v1094
        %v1096 = vpop.f32.mrb[0].mxu0
        %1097 = vmatprep.mubr.f32.mxu0 0.0
        %1098 = vmatmul.mubr.f32.gmra.mrb[0].mxu0 %v958
        %v1099 = vpop.f32.mrb[0].mxu0
        %v1100 = vadd.f32 %v913, %v1099
        %v1101 = vpop.f32.mrb[0].mxu0
        %1102 = vmatprep.mubr.f32.mxu0 0.0
        %1103 = vmatmul.mubr.f32.gmra.mrb[0].mxu0 %v961
        %v1104 = vpop.f32.mrb[0].mxu0
        %v1105 = vadd.f32 %v913, %v1104
        %v1106 = vpop.f32.mrb[0].mxu0
        %1107 = vdwg.mxu0
        %v1108 = vmul.f32 %v1030, 0.5
        %v1109 = vmul.f32 %v1035, 0.5
        %v1110 = vmul.f32 %v1040, 0.5
        %v1111 = vmul.f32 %v1045, 0.5
        %v1112 = vmul.f32 %v1050, 0.5
        %v1113 = vmul.f32 %v1055, 0.5
        %v1114 = vmul.f32 %v1060, 0.5
        %v1115 = vmul.f32 %v1065, 0.5
        %v1116 = vmul.f32 %v1070, 0.5
        %v1117 = vmul.f32 %v1075, 0.5
        %v1118 = vmul.f32 %v1080, 0.5
        %v1119 = vmul.f32 %v1085, 0.5
        %v1120 = vmul.f32 %v1090, 0.5
        %v1121 = vmul.f32 %v1095, 0.5
        %v1122 = vmul.f32 %v1100, 0.5
        %v1123 = vmul.f32 %v1105, 0.5
        %v1124 = vmul.f32 %v1108, 1.442695
        %v1125 = vpow.pop %v1124
        %v1126 = vmul.f32 %v1109, 1.442695
        %v1127 = vpow.pop %v1126
        %v1128 = vmul.f32 %v1110, 1.442695
        %v1129 = vpow.pop %v1128
        %v1130 = vmul.f32 %v1111, 1.442695
        %v1131 = vpow.pop %v1130
        %v1132 = vmul.f32 %v1112, 1.442695
        %v1133 = vpow.pop %v1132
        %v1134 = vmul.f32 %v1113, 1.442695
        %v1135 = vpow.pop %v1134
        %v1136 = vmul.f32 %v1114, 1.442695
        %v1137 = vpow.pop %v1136
        %v1138 = vmul.f32 %v1115, 1.442695
        %v1139 = vpow.pop %v1138
        %v1140 = vmul.f32 %v1116, 1.442695
        %v1141 = vpow.pop %v1140
        %v1142 = vmul.f32 %v1117, 1.442695
        %v1143 = vpow.pop %v1142
        %v1144 = vmul.f32 %v1118, 1.442695
        %v1145 = vpow.pop %v1144
        %v1146 = vmul.f32 %v1119, 1.442695
        %v1147 = vpow.pop %v1146
        %v1148 = vmul.f32 %v1120, 1.442695
        %v1149 = vpow.pop %v1148
        %v1150 = vmul.f32 %v1121, 1.442695
        %v1151 = vpow.pop %v1150
        %v1152 = vmul.f32 %v1122, 1.442695
        %v1153 = vpow.pop %v1152
        %v1154 = vmul.f32 %v1123, 1.442695
        %v1155 = vpow.pop %v1154
        %1172 = vrot.lane.b32.xlu0 %v1125, 30
        %v1173 = vpop.permute.xlu0 %1172
        %1174 = vrot.lane.b32.xlu0 %v1127, 30
        %v1175 = vpop.permute.xlu0 %1174
        %1176 = vrot.lane.b32.xlu0 %v1129, 30
        %v1177 = vpop.permute.xlu0 %1176
        %1178 = vrot.lane.b32.xlu0 %v1131, 30
        %v1179 = vpop.permute.xlu0 %1178
        %1180 = vrot.lane.b32.xlu0 %v1133, 30
        %v1181 = vpop.permute.xlu0 %1180
        %1182 = vrot.lane.b32.xlu0 %v1135, 30
        %v1183 = vpop.permute.xlu0 %1182
        %1184 = vrot.lane.b32.xlu0 %v1137, 30
        %v1185 = vpop.permute.xlu0 %1184
        %1186 = vrot.lane.b32.xlu0 %v1139, 30
        %v1187 = vpop.permute.xlu0 %1186
        %1188 = vrot.lane.b32.xlu0 %v1141, 30
        %v1189 = vpop.permute.xlu0 %1188
        %1190 = vrot.lane.b32.xlu0 %v1143, 30
        %v1191 = vpop.permute.xlu0 %1190
        %1192 = vrot.lane.b32.xlu0 %v1145, 30
        %v1193 = vpop.permute.xlu0 %1192
        %1194 = vrot.lane.b32.xlu0 %v1147, 30
        %v1195 = vpop.permute.xlu0 %1194
        %1196 = vrot.lane.b32.xlu0 %v1149, 30
        %v1197 = vpop.permute.xlu0 %1196
        %1198 = vrot.lane.b32.xlu0 %v1151, 30
        %v1199 = vpop.permute.xlu0 %1198
        %1200 = vrot.lane.b32.xlu0 %v1153, 30
        %v1201 = vpop.permute.xlu0 %1200
        %1202 = vrot.lane.b32.xlu0 %v1155, 30
        %v1203 = vpop.permute.xlu0 %1202
        %v1220 = vmul.f32 %v442, %v1173
        %v1221 = vmul.f32 %v443, %v1175
        %v1222 = vmul.f32 %v444, %v1177
        %v1223 = vmul.f32 %v445, %v1179
        %v1224 = vmul.f32 %v446, %v1181
        %v1225 = vmul.f32 %v447, %v1183
        %v1226 = vmul.f32 %v448, %v1185
        %v1227 = vmul.f32 %v449, %v1187
        %v1228 = vmul.f32 %v450, %v1189
        %v1229 = vmul.f32 %v451, %v1191
        %v1230 = vmul.f32 %v452, %v1193
        %v1231 = vmul.f32 %v453, %v1195
        %v1232 = vmul.f32 %v454, %v1197
        %v1233 = vmul.f32 %v455, %v1199
        %v1234 = vmul.f32 %v456, %v1201
        %v1235 = vmul.f32 %v457, %v1203
        %1252 = vrot.lane.b32.xlu0 %v1220, 96
        %v1253 = vpop.permute.xlu0 %1252
        %1254 = vrot.lane.b32.xlu0 %v1221, 96
        %v1255 = vpop.permute.xlu0 %1254
        %1256 = vrot.lane.b32.xlu0 %v1222, 96
        %v1257 = vpop.permute.xlu0 %1256
        %1258 = vrot.lane.b32.xlu0 %v1223, 96
        %v1259 = vpop.permute.xlu0 %1258
        %1260 = vrot.lane.b32.xlu0 %v1224, 96
        %v1261 = vpop.permute.xlu0 %1260
        %1262 = vrot.lane.b32.xlu0 %v1225, 96
        %v1263 = vpop.permute.xlu0 %1262
        %1264 = vrot.lane.b32.xlu0 %v1226, 96
        %v1265 = vpop.permute.xlu0 %1264
        %1266 = vrot.lane.b32.xlu0 %v1227, 96
        %v1267 = vpop.permute.xlu0 %1266
        %1268 = vrot.lane.b32.xlu0 %v1228, 96
        %v1269 = vpop.permute.xlu0 %1268
        %1270 = vrot.lane.b32.xlu0 %v1229, 96
        %v1271 = vpop.permute.xlu0 %1270
        %1272 = vrot.lane.b32.xlu0 %v1230, 96
        %v1273 = vpop.permute.xlu0 %1272
        %1274 = vrot.lane.b32.xlu0 %v1231, 96
        %v1275 = vpop.permute.xlu0 %1274
        %1276 = vrot.lane.b32.xlu0 %v1232, 96
        %v1277 = vpop.permute.xlu0 %1276
        %1278 = vrot.lane.b32.xlu0 %v1233, 96
        %v1279 = vpop.permute.xlu0 %1278
        %1280 = vrot.lane.b32.xlu0 %v1234, 96
        %v1281 = vpop.permute.xlu0 %1280
        %1282 = vrot.lane.b32.xlu0 %v1235, 96
        %v1283 = vpop.permute.xlu0 %1282
        %v1300 = vadd.f32 %v1030, %v1253
        %v1301 = vadd.f32 %v1035, %v1255
        %v1302 = vadd.f32 %v1040, %v1257
        %v1303 = vadd.f32 %v1045, %v1259
        %v1304 = vadd.f32 %v1050, %v1261
        %v1305 = vadd.f32 %v1055, %v1263
        %v1306 = vadd.f32 %v1060, %v1265
        %v1307 = vadd.f32 %v1065, %v1267
        %v1308 = vadd.f32 %v1070, %v1269
        %v1309 = vadd.f32 %v1075, %v1271
        %v1310 = vadd.f32 %v1080, %v1273
        %v1311 = vadd.f32 %v1085, %v1275
        %v1312 = vadd.f32 %v1090, %v1277
        %v1313 = vadd.f32 %v1095, %v1279
        %v1314 = vadd.f32 %v1100, %v1281
        %v1315 = vadd.f32 %v1105, %v1283
        %v1316 = vld [vmem:[%s7] sm:$0x3]
        %v1317 = vld [vmem:[%s8] sm:$0x1]
        %v1319 = vlaneseq
        %v1320 = vshrl.u32 %v1319, 7
        %v1321 = vsub.s32 0, %v1320
        %v1322 = vrot.slane %v1317, %v1321
        %vm1324 = vcmask 15360
        %v1326 = vsel %vm1324, %v1300, 0
        %v1329 = vsel %vm1324, %v1301, 0
        %v1332 = vsel %vm1324, %v1302, 0
        %v1335 = vsel %vm1324, %v1303, 0
        %v1338 = vsel %vm1324, %v1304, 0
        %v1341 = vsel %vm1324, %v1305, 0
        %v1344 = vsel %vm1324, %v1306, 0
        %v1347 = vsel %vm1324, %v1307, 0
        %v1350 = vsel %vm1324, %v1308, 0
        %v1353 = vsel %vm1324, %v1309, 0
        %v1356 = vsel %vm1324, %v1310, 0
        %v1359 = vsel %vm1324, %v1311, 0
        %v1362 = vsel %vm1324, %v1312, 0
        %v1365 = vsel %vm1324, %v1313, 0
        %v1368 = vsel %vm1324, %v1314, 0
        %v1371 = vsel %vm1324, %v1315, 0
        %vm1373 = vcmask 1041408
        %v1375 = vsel %vm1373, %v1316, 0
        %1377 = vmatprep.subr.mxu0 0.0
        %1378 = vmatpush1.msra.mxu0 %v1375
        %1379 = vmatprep.subr.mxu0 0.0
        %1380 = vmatpush1.msra.mxu0 0.0
        %1381 = vmatprep.subr.mxu0 0.0
        %1382 = vmatpush1.msra.mxu0 0.0
        %1383 = vmatprep.subr.mxu0 0.0
        %1384 = vmatpush1.msra.mxu0 0.0
        %1385 = vmatprep.subr.mxu0 0.0
        %1386 = vmatpush1.msra.mxu0 0.0
        %1387 = vmatprep.subr.mxu0 0.0
        %1388 = vmatpush1.msra.mxu0 0.0
        %1389 = vmatprep.subr.mxu0 0.0
        %1390 = vmatpush1.msra.mxu0 0.0
        %1391 = vmatprep.subr.mxu0 0.0
        %1392 = vmatpush1.msra.mxu0 0.0
        %1393 = vmatprep.subr.mxu0 0.0
        %1394 = vmatpush1.msra.mxu0 0.0
        %1395 = vmatprep.subr.mxu0 0.0
        %1396 = vmatpush1.msra.mxu0 0.0
        %1397 = vmatprep.subr.mxu0 0.0
        %1398 = vmatpush1.msra.mxu0 0.0
        %1399 = vmatprep.subr.mxu0 0.0
        %1400 = vmatpush1.msra.mxu0 0.0
        %1401 = vmatprep.subr.mxu0 0.0
        %1402 = vmatpush1.msra.mxu0 0.0
        %1403 = vmatprep.subr.mxu0 0.0
        %1404 = vmatpush1.msra.mxu0 0.0
        %1405 = vmatprep.subr.mxu0 0.0
        %1406 = vmatpush1.msra.mxu0 0.0
        %1407 = vmatprep.subr.mxu0 0.0
        %1408 = vmatpush1.msra.mxu0 0.0
        %1409 = vmatprep.subr.mxu0 0.0
        %1410 = vmatpush1.msra.mxu0 0.0
        %1411 = vmatprep.subr.mxu0 0.0
        %1412 = vmatpush1.msra.mxu0 0.0
        %1413 = vmatprep.subr.mxu0 0.0
        %1414 = vmatpush1.msra.mxu0 0.0
        %1415 = vmatprep.subr.mxu0 0.0
        %1416 = vmatpush1.msra.mxu0 0.0
        %1417 = vmatprep.subr.mxu0 0.0
        %1418 = vmatpush1.msra.mxu0 0.0
        %1419 = vmatprep.subr.mxu0 0.0
        %1420 = vmatpush1.msra.mxu0 0.0
        %1421 = vmatprep.subr.mxu0 0.0
        %1422 = vmatpush1.msra.mxu0 0.0
        %1423 = vmatprep.subr.mxu0 0.0
        %1424 = vmatpush1.msra.mxu0 0.0
        %1425 = vmatprep.subr.mxu0 0.0
        %1426 = vmatpush1.msra.mxu0 0.0
        %1427 = vmatprep.subr.mxu0 0.0
        %1428 = vmatpush1.msra.mxu0 0.0
        %1429 = vmatprep.subr.mxu0 0.0
        %1430 = vmatpush1.msra.mxu0 0.0
        %1431 = vmatprep.subr.mxu0 0.0
        %1432 = vmatpush1.msra.mxu0 0.0
        %1433 = vmatprep.subr.mxu0 0.0
        %1434 = vmatpush1.msra.mxu0 0.0
        %1435 = vmatprep.subr.mxu0 0.0
        %1436 = vmatpush1.msra.mxu0 0.0
        %1437 = vmatprep.subr.mxu0 0.0
        %1438 = vmatpush1.msra.mxu0 0.0
        %1439 = vmatprep.subr.mxu0 0.0
        %1440 = vmatpush1.msra.mxu0 0.0
        %1441 = vmatprep.mubr.f32.mxu0 0.0
        %1442 = vmatmul.mubr.f32.gmra.mrb[0].mxu0 %v1326
        %v1443 = vpop.f32.mrb[0].mxu0
        %v1444 = vadd.f32 %v1322, %v1443
        %v1445 = vpop.f32.mrb[0].mxu0
        %1446 = vmatprep.mubr.f32.mxu0 0.0
        %1447 = vmatmul.mubr.f32.gmra.mrb[0].mxu0 %v1329
        %v1448 = vpop.f32.mrb[0].mxu0
        %v1449 = vadd.f32 %v1322, %v1448
        %v1450 = vpop.f32.mrb[0].mxu0
        %1451 = vmatprep.mubr.f32.mxu0 0.0
        %1452 = vmatmul.mubr.f32.gmra.mrb[0].mxu0 %v1332
        %v1453 = vpop.f32.mrb[0].mxu0
        %v1454 = vadd.f32 %v1322, %v1453
        %v1455 = vpop.f32.mrb[0].mxu0
        %1456 = vmatprep.mubr.f32.mxu0 0.0
        %1457 = vmatmul.mubr.f32.gmra.mrb[0].mxu0 %v1335
        %v1458 = vpop.f32.mrb[0].mxu0
        %v1459 = vadd.f32 %v1322, %v1458
        %v1460 = vpop.f32.mrb[0].mxu0
        %1461 = vmatprep.mubr.f32.mxu0 0.0
        %1462 = vmatmul.mubr.f32.gmra.mrb[0].mxu0 %v1338
        %v1463 = vpop.f32.mrb[0].mxu0
        %v1464 = vadd.f32 %v1322, %v1463
        %v1465 = vpop.f32.mrb[0].mxu0
        %1466 = vmatprep.mubr.f32.mxu0 0.0
        %1467 = vmatmul.mubr.f32.gmra.mrb[0].mxu0 %v1341
        %v1468 = vpop.f32.mrb[0].mxu0
        %v1469 = vadd.f32 %v1322, %v1468
        %v1470 = vpop.f32.mrb[0].mxu0
        %1471 = vmatprep.mubr.f32.mxu0 0.0
        %1472 = vmatmul.mubr.f32.gmra.mrb[0].mxu0 %v1344
        %v1473 = vpop.f32.mrb[0].mxu0
        %v1474 = vadd.f32 %v1322, %v1473
        %v1475 = vpop.f32.mrb[0].mxu0
        %1476 = vmatprep.mubr.f32.mxu0 0.0
        %1477 = vmatmul.mubr.f32.gmra.mrb[0].mxu0 %v1347
        %v1478 = vpop.f32.mrb[0].mxu0
        %v1479 = vadd.f32 %v1322, %v1478
        %v1480 = vpop.f32.mrb[0].mxu0
        %1481 = vmatprep.mubr.f32.mxu0 0.0
        %1482 = vmatmul.mubr.f32.gmra.mrb[0].mxu0 %v1350
        %v1483 = vpop.f32.mrb[0].mxu0
        %v1484 = vadd.f32 %v1322, %v1483
        %v1485 = vpop.f32.mrb[0].mxu0
        %1486 = vmatprep.mubr.f32.mxu0 0.0
        %1487 = vmatmul.mubr.f32.gmra.mrb[0].mxu0 %v1353
        %v1488 = vpop.f32.mrb[0].mxu0
        %v1489 = vadd.f32 %v1322, %v1488
        %v1490 = vpop.f32.mrb[0].mxu0
        %1491 = vmatprep.mubr.f32.mxu0 0.0
        %1492 = vmatmul.mubr.f32.gmra.mrb[0].mxu0 %v1356
        %v1493 = vpop.f32.mrb[0].mxu0
        %v1494 = vadd.f32 %v1322, %v1493
        %v1495 = vpop.f32.mrb[0].mxu0
        %1496 = vmatprep.mubr.f32.mxu0 0.0
        %1497 = vmatmul.mubr.f32.gmra.mrb[0].mxu0 %v1359
        %v1498 = vpop.f32.mrb[0].mxu0
        %v1499 = vadd.f32 %v1322, %v1498
        %v1500 = vpop.f32.mrb[0].mxu0
        %1501 = vmatprep.mubr.f32.mxu0 0.0
        %1502 = vmatmul.mubr.f32.gmra.mrb[0].mxu0 %v1362
        %v1503 = vpop.f32.mrb[0].mxu0
        %v1504 = vadd.f32 %v1322, %v1503
        %v1505 = vpop.f32.mrb[0].mxu0
        %1506 = vmatprep.mubr.f32.mxu0 0.0
        %1507 = vmatmul.mubr.f32.gmra.mrb[0].mxu0 %v1365
        %v1508 = vpop.f32.mrb[0].mxu0
        %v1509 = vadd.f32 %v1322, %v1508
        %v1510 = vpop.f32.mrb[0].mxu0
        %1511 = vmatprep.mubr.f32.mxu0 0.0
        %1512 = vmatmul.mubr.f32.gmra.mrb[0].mxu0 %v1368
        %v1513 = vpop.f32.mrb[0].mxu0
        %v1514 = vadd.f32 %v1322, %v1513
        %v1515 = vpop.f32.mrb[0].mxu0
        %1516 = vmatprep.mubr.f32.mxu0 0.0
        %1517 = vmatmul.mubr.f32.gmra.mrb[0].mxu0 %v1371
        %v1518 = vpop.f32.mrb[0].mxu0
        %v1519 = vadd.f32 %v1322, %v1518
        %v1520 = vpop.f32.mrb[0].mxu0
        %1521 = vdwg.mxu0
        %v1522 = vmax.f32 %v1444, 0.0
        %v1523 = vmax.f32 %v1449, 0.0
        %v1524 = vmax.f32 %v1454, 0.0
        %v1525 = vmax.f32 %v1459, 0.0
        %v1526 = vmax.f32 %v1464, 0.0
        %v1527 = vmax.f32 %v1469, 0.0
        %v1528 = vmax.f32 %v1474, 0.0
        %v1529 = vmax.f32 %v1479, 0.0
        %v1530 = vmax.f32 %v1484, 0.0
        %v1531 = vmax.f32 %v1489, 0.0
        %v1532 = vmax.f32 %v1494, 0.0
        %v1533 = vmax.f32 %v1499, 0.0
        %v1534 = vmax.f32 %v1504, 0.0
        %v1535 = vmax.f32 %v1509, 0.0
        %v1536 = vmax.f32 %v1514, 0.0
        %v1537 = vmax.f32 %v1519, 0.0
        %v1538 = vld [vmem:[%s9] sm:$0xff]
        %v1539 = vld [vmem:[%s9 + $0x8] sm:$0xff]
        %v1540 = vld [vmem:[%s9 + $0x10] sm:$0xff]
        %v1541 = vld [vmem:[%s9 + $0x18] sm:$0xff]
        %v1542 = vld [vmem:[%s10] sm:$0x1]
        %v1544 = vlaneseq
        %v1545 = vshrl.u32 %v1544, 7
        %v1546 = vsub.s32 0, %v1545
        %v1547 = vrot.slane %v1542, %v1546
        %v1550 = vsel %vm469, %v1522, 0
        %v1553 = vsel %vm469, %v1523, 0
        %v1556 = vsel %vm469, %v1524, 0
        %v1559 = vsel %vm469, %v1525, 0
        %v1562 = vsel %vm469, %v1526, 0
        %v1565 = vsel %vm469, %v1527, 0
        %v1568 = vsel %vm469, %v1528, 0
        %v1571 = vsel %vm469, %v1529, 0
        %v1574 = vsel %vm469, %v1530, 0
        %v1577 = vsel %vm469, %v1531, 0
        %v1580 = vsel %vm469, %v1532, 0
        %v1583 = vsel %vm469, %v1533, 0
        %v1586 = vsel %vm469, %v1534, 0
        %v1589 = vsel %vm469, %v1535, 0
        %v1592 = vsel %vm469, %v1536, 0
        %v1595 = vsel %vm469, %v1537, 0
        %1597 = vmatprep.subr.mxu0 0.0
        %1598 = vmatpush1.msra.mxu0 %v1538
        %1599 = vmatprep.subr.mxu0 0.0
        %1600 = vmatpush1.msra.mxu0 %v1539
        %1601 = vmatprep.subr.mxu0 0.0
        %1602 = vmatpush1.msra.mxu0 %v1540
        %1603 = vmatprep.subr.mxu0 0.0
        %1604 = vmatpush1.msra.mxu0 %v1541
        %1605 = vmatprep.subr.mxu0 0.0
        %1606 = vmatpush1.msra.mxu0 0.0
        %1607 = vmatprep.subr.mxu0 0.0
        %1608 = vmatpush1.msra.mxu0 0.0
        %1609 = vmatprep.subr.mxu0 0.0
        %1610 = vmatpush1.msra.mxu0 0.0
        %1611 = vmatprep.subr.mxu0 0.0
        %1612 = vmatpush1.msra.mxu0 0.0
        %1613 = vmatprep.subr.mxu0 0.0
        %1614 = vmatpush1.msra.mxu0 0.0
        %1615 = vmatprep.subr.mxu0 0.0
        %1616 = vmatpush1.msra.mxu0 0.0
        %1617 = vmatprep.subr.mxu0 0.0
        %1618 = vmatpush1.msra.mxu0 0.0
        %1619 = vmatprep.subr.mxu0 0.0
        %1620 = vmatpush1.msra.mxu0 0.0
        %1621 = vmatprep.subr.mxu0 0.0
        %1622 = vmatpush1.msra.mxu0 0.0
        %1623 = vmatprep.subr.mxu0 0.0
        %1624 = vmatpush1.msra.mxu0 0.0
        %1625 = vmatprep.subr.mxu0 0.0
        %1626 = vmatpush1.msra.mxu0 0.0
        %1627 = vmatprep.subr.mxu0 0.0
        %1628 = vmatpush1.msra.mxu0 0.0
        %1629 = vmatprep.subr.mxu0 0.0
        %1630 = vmatpush1.msra.mxu0 0.0
        %1631 = vmatprep.subr.mxu0 0.0
        %1632 = vmatpush1.msra.mxu0 0.0
        %1633 = vmatprep.subr.mxu0 0.0
        %1634 = vmatpush1.msra.mxu0 0.0
        %1635 = vmatprep.subr.mxu0 0.0
        %1636 = vmatpush1.msra.mxu0 0.0
        %1637 = vmatprep.subr.mxu0 0.0
        %1638 = vmatpush1.msra.mxu0 0.0
        %1639 = vmatprep.subr.mxu0 0.0
        %1640 = vmatpush1.msra.mxu0 0.0
        %1641 = vmatprep.subr.mxu0 0.0
        %1642 = vmatpush1.msra.mxu0 0.0
        %1643 = vmatprep.subr.mxu0 0.0
        %1644 = vmatpush1.msra.mxu0 0.0
        %1645 = vmatprep.subr.mxu0 0.0
        %1646 = vmatpush1.msra.mxu0 0.0
        %1647 = vmatprep.subr.mxu0 0.0
        %1648 = vmatpush1.msra.mxu0 0.0
        %1649 = vmatprep.subr.mxu0 0.0
        %1650 = vmatpush1.msra.mxu0 0.0
        %1651 = vmatprep.subr.mxu0 0.0
        %1652 = vmatpush1.msra.mxu0 0.0
        %1653 = vmatprep.subr.mxu0 0.0
        %1654 = vmatpush1.msra.mxu0 0.0
        %1655 = vmatprep.subr.mxu0 0.0
        %1656 = vmatpush1.msra.mxu0 0.0
        %1657 = vmatprep.subr.mxu0 0.0
        %1658 = vmatpush1.msra.mxu0 0.0
        %1659 = vmatprep.subr.mxu0 0.0
        %1660 = vmatpush1.msra.mxu0 0.0
        %1661 = vmatprep.mubr.f32.mxu0 0.0
        %1662 = vmatmul.mubr.f32.gmra.mrb[0].mxu0 %v1550
        %v1663 = vpop.f32.mrb[0].mxu0
        %v1664 = vadd.f32 %v1547, %v1663
        %v1665 = vpop.f32.mrb[0].mxu0
        %1666 = vmatprep.mubr.f32.mxu0 0.0
        %1667 = vmatmul.mubr.f32.gmra.mrb[0].mxu0 %v1553
        %v1668 = vpop.f32.mrb[0].mxu0
        %v1669 = vadd.f32 %v1547, %v1668
        %v1670 = vpop.f32.mrb[0].mxu0
        %1671 = vmatprep.mubr.f32.mxu0 0.0
        %1672 = vmatmul.mubr.f32.gmra.mrb[0].mxu0 %v1556
        %v1673 = vpop.f32.mrb[0].mxu0
        %v1674 = vadd.f32 %v1547, %v1673
        %v1675 = vpop.f32.mrb[0].mxu0
        %1676 = vmatprep.mubr.f32.mxu0 0.0
        %1677 = vmatmul.mubr.f32.gmra.mrb[0].mxu0 %v1559
        %v1678 = vpop.f32.mrb[0].mxu0
        %v1679 = vadd.f32 %v1547, %v1678
        %v1680 = vpop.f32.mrb[0].mxu0
        %1681 = vmatprep.mubr.f32.mxu0 0.0
        %1682 = vmatmul.mubr.f32.gmra.mrb[0].mxu0 %v1562
        %v1683 = vpop.f32.mrb[0].mxu0
        %v1684 = vadd.f32 %v1547, %v1683
        %v1685 = vpop.f32.mrb[0].mxu0
        %1686 = vmatprep.mubr.f32.mxu0 0.0
        %1687 = vmatmul.mubr.f32.gmra.mrb[0].mxu0 %v1565
        %v1688 = vpop.f32.mrb[0].mxu0
        %v1689 = vadd.f32 %v1547, %v1688
        %v1690 = vpop.f32.mrb[0].mxu0
        %1691 = vmatprep.mubr.f32.mxu0 0.0
        %1692 = vmatmul.mubr.f32.gmra.mrb[0].mxu0 %v1568
        %v1693 = vpop.f32.mrb[0].mxu0
        %v1694 = vadd.f32 %v1547, %v1693
        %v1695 = vpop.f32.mrb[0].mxu0
        %1696 = vmatprep.mubr.f32.mxu0 0.0
        %1697 = vmatmul.mubr.f32.gmra.mrb[0].mxu0 %v1571
        %v1698 = vpop.f32.mrb[0].mxu0
        %v1699 = vadd.f32 %v1547, %v1698
        %v1700 = vpop.f32.mrb[0].mxu0
        %1701 = vmatprep.mubr.f32.mxu0 0.0
        %1702 = vmatmul.mubr.f32.gmra.mrb[0].mxu0 %v1574
        %v1703 = vpop.f32.mrb[0].mxu0
        %v1704 = vadd.f32 %v1547, %v1703
        %v1705 = vpop.f32.mrb[0].mxu0
        %1706 = vmatprep.mubr.f32.mxu0 0.0
        %1707 = vmatmul.mubr.f32.gmra.mrb[0].mxu0 %v1577
        %v1708 = vpop.f32.mrb[0].mxu0
        %v1709 = vadd.f32 %v1547, %v1708
        %v1710 = vpop.f32.mrb[0].mxu0
        %1711 = vmatprep.mubr.f32.mxu0 0.0
        %1712 = vmatmul.mubr.f32.gmra.mrb[0].mxu0 %v1580
        %v1713 = vpop.f32.mrb[0].mxu0
        %v1714 = vadd.f32 %v1547, %v1713
        %v1715 = vpop.f32.mrb[0].mxu0
        %1716 = vmatprep.mubr.f32.mxu0 0.0
        %1717 = vmatmul.mubr.f32.gmra.mrb[0].mxu0 %v1583
        %v1718 = vpop.f32.mrb[0].mxu0
        %v1719 = vadd.f32 %v1547, %v1718
        %v1720 = vpop.f32.mrb[0].mxu0
        %1721 = vmatprep.mubr.f32.mxu0 0.0
        %1722 = vmatmul.mubr.f32.gmra.mrb[0].mxu0 %v1586
        %v1723 = vpop.f32.mrb[0].mxu0
        %v1724 = vadd.f32 %v1547, %v1723
        %v1725 = vpop.f32.mrb[0].mxu0
        %1726 = vmatprep.mubr.f32.mxu0 0.0
        %1727 = vmatmul.mubr.f32.gmra.mrb[0].mxu0 %v1589
        %v1728 = vpop.f32.mrb[0].mxu0
        %v1729 = vadd.f32 %v1547, %v1728
        %v1730 = vpop.f32.mrb[0].mxu0
        %1731 = vmatprep.mubr.f32.mxu0 0.0
        %1732 = vmatmul.mubr.f32.gmra.mrb[0].mxu0 %v1592
        %v1733 = vpop.f32.mrb[0].mxu0
        %v1734 = vadd.f32 %v1547, %v1733
        %v1735 = vpop.f32.mrb[0].mxu0
        %1736 = vmatprep.mubr.f32.mxu0 0.0
        %1737 = vmatmul.mubr.f32.gmra.mrb[0].mxu0 %v1595
        %v1738 = vpop.f32.mrb[0].mxu0
        %v1739 = vadd.f32 %v1547, %v1738
        %v1740 = vpop.f32.mrb[0].mxu0
        %1741 = vdwg.mxu0
        %v1742 = vmax.f32 %v1664, 0.0
        %v1743 = vmax.f32 %v1669, 0.0
        %v1744 = vmax.f32 %v1674, 0.0
        %v1745 = vmax.f32 %v1679, 0.0
        %v1746 = vmax.f32 %v1684, 0.0
        %v1747 = vmax.f32 %v1689, 0.0
        %v1748 = vmax.f32 %v1694, 0.0
        %v1749 = vmax.f32 %v1699, 0.0
        %v1750 = vmax.f32 %v1704, 0.0
        %v1751 = vmax.f32 %v1709, 0.0
        %v1752 = vmax.f32 %v1714, 0.0
        %v1753 = vmax.f32 %v1719, 0.0
        %v1754 = vmax.f32 %v1724, 0.0
        %v1755 = vmax.f32 %v1729, 0.0
        %v1756 = vmax.f32 %v1734, 0.0
        %v1757 = vmax.f32 %v1739, 0.0
        %v1758 = vld [vmem:[%s11] sm:$0xff]
        %v1759 = vld [vmem:[%s11 + $0x8] sm:$0xff]
        %v1760 = vld [vmem:[%s11 + $0x10] sm:$0xff]
        %v1761 = vld [vmem:[%s11 + $0x18] sm:$0xff]
        %v1762 = vld [vmem:[%s11 + $0x20] sm:$0xff]
        %v1763 = vld [vmem:[%s11 + $0x28] sm:$0xff]
        %v1764 = vld [vmem:[%s11 + $0x30] sm:$0xff]
        %v1765 = vld [vmem:[%s11 + $0x38] sm:$0xff]
        %v1766 = vld [vmem:[%s12] sm:$0x1]
        %v1768 = vlaneseq
        %v1769 = vshrl.u32 %v1768, 7
        %v1770 = vsub.s32 0, %v1769
        %v1771 = vrot.slane %v1766, %v1770
        %v1774 = vsel %vm694, %v1742, 0
        %v1777 = vsel %vm694, %v1743, 0
        %v1780 = vsel %vm694, %v1744, 0
        %v1783 = vsel %vm694, %v1745, 0
        %v1786 = vsel %vm694, %v1746, 0
        %v1789 = vsel %vm694, %v1747, 0
        %v1792 = vsel %vm694, %v1748, 0
        %v1795 = vsel %vm694, %v1749, 0
        %v1798 = vsel %vm694, %v1750, 0
        %v1801 = vsel %vm694, %v1751, 0
        %v1804 = vsel %vm694, %v1752, 0
        %v1807 = vsel %vm694, %v1753, 0
        %v1810 = vsel %vm694, %v1754, 0
        %v1813 = vsel %vm694, %v1755, 0
        %v1816 = vsel %vm694, %v1756, 0
        %v1819 = vsel %vm694, %v1757, 0
        %1821 = vmatprep.subr.mxu0 0.0
        %1822 = vmatpush1.msra.mxu0 %v1758
        %1823 = vmatprep.subr.mxu0 0.0
        %1824 = vmatpush1.msra.mxu0 %v1759
        %1825 = vmatprep.subr.mxu0 0.0
        %1826 = vmatpush1.msra.mxu0 %v1760
        %1827 = vmatprep.subr.mxu0 0.0
        %1828 = vmatpush1.msra.mxu0 %v1761
        %1829 = vmatprep.subr.mxu0 0.0
        %1830 = vmatpush1.msra.mxu0 %v1762
        %1831 = vmatprep.subr.mxu0 0.0
        %1832 = vmatpush1.msra.mxu0 %v1763
        %1833 = vmatprep.subr.mxu0 0.0
        %1834 = vmatpush1.msra.mxu0 %v1764
        %1835 = vmatprep.subr.mxu0 0.0
        %1836 = vmatpush1.msra.mxu0 %v1765
        %1837 = vmatprep.subr.mxu0 0.0
        %1838 = vmatpush1.msra.mxu0 0.0
        %1839 = vmatprep.subr.mxu0 0.0
        %1840 = vmatpush1.msra.mxu0 0.0
        %1841 = vmatprep.subr.mxu0 0.0
        %1842 = vmatpush1.msra.mxu0 0.0
        %1843 = vmatprep.subr.mxu0 0.0
        %1844 = vmatpush1.msra.mxu0 0.0
        %1845 = vmatprep.subr.mxu0 0.0
        %1846 = vmatpush1.msra.mxu0 0.0
        %1847 = vmatprep.subr.mxu0 0.0
        %1848 = vmatpush1.msra.mxu0 0.0
        %1849 = vmatprep.subr.mxu0 0.0
        %1850 = vmatpush1.msra.mxu0 0.0
        %1851 = vmatprep.subr.mxu0 0.0
        %1852 = vmatpush1.msra.mxu0 0.0
        %1853 = vmatprep.subr.mxu0 0.0
        %1854 = vmatpush1.msra.mxu0 0.0
        %1855 = vmatprep.subr.mxu0 0.0
        %1856 = vmatpush1.msra.mxu0 0.0
        %1857 = vmatprep.subr.mxu0 0.0
        %1858 = vmatpush1.msra.mxu0 0.0
        %1859 = vmatprep.subr.mxu0 0.0
        %1860 = vmatpush1.msra.mxu0 0.0
        %1861 = vmatprep.subr.mxu0 0.0
        %1862 = vmatpush1.msra.mxu0 0.0
        %1863 = vmatprep.subr.mxu0 0.0
        %1864 = vmatpush1.msra.mxu0 0.0
        %1865 = vmatprep.subr.mxu0 0.0
        %1866 = vmatpush1.msra.mxu0 0.0
        %1867 = vmatprep.subr.mxu0 0.0
        %1868 = vmatpush1.msra.mxu0 0.0
        %1869 = vmatprep.subr.mxu0 0.0
        %1870 = vmatpush1.msra.mxu0 0.0
        %1871 = vmatprep.subr.mxu0 0.0
        %1872 = vmatpush1.msra.mxu0 0.0
        %1873 = vmatprep.subr.mxu0 0.0
        %1874 = vmatpush1.msra.mxu0 0.0
        %1875 = vmatprep.subr.mxu0 0.0
        %1876 = vmatpush1.msra.mxu0 0.0
        %1877 = vmatprep.subr.mxu0 0.0
        %1878 = vmatpush1.msra.mxu0 0.0
        %1879 = vmatprep.subr.mxu0 0.0
        %1880 = vmatpush1.msra.mxu0 0.0
        %1881 = vmatprep.subr.mxu0 0.0
        %1882 = vmatpush1.msra.mxu0 0.0
        %1883 = vmatprep.subr.mxu0 0.0
        %1884 = vmatpush1.msra.mxu0 0.0
        %1885 = vmatprep.mubr.f32.mxu0 0.0
        %1886 = vmatmul.mubr.f32.gmra.mrb[0].mxu0 %v1774
        %v1887 = vpop.f32.mrb[0].mxu0
        %v1888 = vadd.f32 %v1771, %v1887
        %v1889 = vpop.f32.mrb[0].mxu0
        %1890 = vmatprep.mubr.f32.mxu0 0.0
        %1891 = vmatmul.mubr.f32.gmra.mrb[0].mxu0 %v1777
        %v1892 = vpop.f32.mrb[0].mxu0
        %v1893 = vadd.f32 %v1771, %v1892
        %v1894 = vpop.f32.mrb[0].mxu0
        %1895 = vmatprep.mubr.f32.mxu0 0.0
        %1896 = vmatmul.mubr.f32.gmra.mrb[0].mxu0 %v1780
        %v1897 = vpop.f32.mrb[0].mxu0
        %v1898 = vadd.f32 %v1771, %v1897
        %v1899 = vpop.f32.mrb[0].mxu0
        %1900 = vmatprep.mubr.f32.mxu0 0.0
        %1901 = vmatmul.mubr.f32.gmra.mrb[0].mxu0 %v1783
        %v1902 = vpop.f32.mrb[0].mxu0
        %v1903 = vadd.f32 %v1771, %v1902
        %v1904 = vpop.f32.mrb[0].mxu0
        %1905 = vmatprep.mubr.f32.mxu0 0.0
        %1906 = vmatmul.mubr.f32.gmra.mrb[0].mxu0 %v1786
        %v1907 = vpop.f32.mrb[0].mxu0
        %v1908 = vadd.f32 %v1771, %v1907
        %v1909 = vpop.f32.mrb[0].mxu0
        %1910 = vmatprep.mubr.f32.mxu0 0.0
        %1911 = vmatmul.mubr.f32.gmra.mrb[0].mxu0 %v1789
        %v1912 = vpop.f32.mrb[0].mxu0
        %v1913 = vadd.f32 %v1771, %v1912
        %v1914 = vpop.f32.mrb[0].mxu0
        %1915 = vmatprep.mubr.f32.mxu0 0.0
        %1916 = vmatmul.mubr.f32.gmra.mrb[0].mxu0 %v1792
        %v1917 = vpop.f32.mrb[0].mxu0
        %v1918 = vadd.f32 %v1771, %v1917
        %v1919 = vpop.f32.mrb[0].mxu0
        %1920 = vmatprep.mubr.f32.mxu0 0.0
        %1921 = vmatmul.mubr.f32.gmra.mrb[0].mxu0 %v1795
        %v1922 = vpop.f32.mrb[0].mxu0
        %v1923 = vadd.f32 %v1771, %v1922
        %v1924 = vpop.f32.mrb[0].mxu0
        %1925 = vmatprep.mubr.f32.mxu0 0.0
        %1926 = vmatmul.mubr.f32.gmra.mrb[0].mxu0 %v1798
        %v1927 = vpop.f32.mrb[0].mxu0
        %v1928 = vadd.f32 %v1771, %v1927
        %v1929 = vpop.f32.mrb[0].mxu0
        %1930 = vmatprep.mubr.f32.mxu0 0.0
        %1931 = vmatmul.mubr.f32.gmra.mrb[0].mxu0 %v1801
        %v1932 = vpop.f32.mrb[0].mxu0
        %v1933 = vadd.f32 %v1771, %v1932
        %v1934 = vpop.f32.mrb[0].mxu0
        %1935 = vmatprep.mubr.f32.mxu0 0.0
        %1936 = vmatmul.mubr.f32.gmra.mrb[0].mxu0 %v1804
        %v1937 = vpop.f32.mrb[0].mxu0
        %v1938 = vadd.f32 %v1771, %v1937
        %v1939 = vpop.f32.mrb[0].mxu0
        %1940 = vmatprep.mubr.f32.mxu0 0.0
        %1941 = vmatmul.mubr.f32.gmra.mrb[0].mxu0 %v1807
        %v1942 = vpop.f32.mrb[0].mxu0
        %v1943 = vadd.f32 %v1771, %v1942
        %v1944 = vpop.f32.mrb[0].mxu0
        %1945 = vmatprep.mubr.f32.mxu0 0.0
        %1946 = vmatmul.mubr.f32.gmra.mrb[0].mxu0 %v1810
        %v1947 = vpop.f32.mrb[0].mxu0
        %v1948 = vadd.f32 %v1771, %v1947
        %v1949 = vpop.f32.mrb[0].mxu0
        %1950 = vmatprep.mubr.f32.mxu0 0.0
        %1951 = vmatmul.mubr.f32.gmra.mrb[0].mxu0 %v1813
        %v1952 = vpop.f32.mrb[0].mxu0
        %v1953 = vadd.f32 %v1771, %v1952
        %v1954 = vpop.f32.mrb[0].mxu0
        %1955 = vmatprep.mubr.f32.mxu0 0.0
        %1956 = vmatmul.mubr.f32.gmra.mrb[0].mxu0 %v1816
        %v1957 = vpop.f32.mrb[0].mxu0
        %v1958 = vadd.f32 %v1771, %v1957
        %v1959 = vpop.f32.mrb[0].mxu0
        %1960 = vmatprep.mubr.f32.mxu0 0.0
        %1961 = vmatmul.mubr.f32.gmra.mrb[0].mxu0 %v1819
        %v1962 = vpop.f32.mrb[0].mxu0
        %v1963 = vadd.f32 %v1771, %v1962
        %v1964 = vpop.f32.mrb[0].mxu0
        %1965 = vdwg.mxu0
        %v1966 = vlaneseq
        %v1967 = vand.u32 %v1966, 127
        %vm1968 = vcmp.ge.s32.totalorder %v1967, 6
        %vm1969 = vcmp.lt.s32.totalorder %v1967, 11
        %vm1970 = vmand %vm1968, %vm1969
        %v1971 = vsel %vm1970, %v1888, -inf
        %v1972 = vsel %vm1970, %v1893, -inf
        %v1973 = vsel %vm1970, %v1898, -inf
        %v1974 = vsel %vm1970, %v1903, -inf
        %v1975 = vsel %vm1970, %v1908, -inf
        %v1976 = vsel %vm1970, %v1913, -inf
        %v1977 = vsel %vm1970, %v1918, -inf
        %v1978 = vsel %vm1970, %v1923, -inf
        %v1979 = vsel %vm1970, %v1928, -inf
        %v1980 = vsel %vm1970, %v1933, -inf
        %v1981 = vsel %vm1970, %v1938, -inf
        %v1982 = vsel %vm1970, %v1943, -inf
        %v1983 = vsel %vm1970, %v1948, -inf
        %v1984 = vsel %vm1970, %v1953, -inf
        %v1985 = vsel %vm1970, %v1958, -inf
        %v1986 = vsel %vm1970, %v1963, -inf
        %vm1987 = vcmask 89088
        %v1988 = vsel %vm1987, %v1971, -inf
        %1989 = vmax.xlane.f32.xlu0 %v1988
        %v1990 = vpop.xlane.xlu0 %1989
        %v1991 = vsel %vm1987, %v1972, -inf
        %1992 = vmax.xlane.f32.xlu0 %v1991
        %v1993 = vpop.xlane.xlu0 %1992
        %v1994 = vsel %vm1987, %v1973, -inf
        %1995 = vmax.xlane.f32.xlu0 %v1994
        %v1996 = vpop.xlane.xlu0 %1995
        %v1997 = vsel %vm1987, %v1974, -inf
        %1998 = vmax.xlane.f32.xlu0 %v1997
        %v1999 = vpop.xlane.xlu0 %1998
        %v2000 = vsel %vm1987, %v1975, -inf
        %2001 = vmax.xlane.f32.xlu0 %v2000
        %v2002 = vpop.xlane.xlu0 %2001
        %v2003 = vsel %vm1987, %v1976, -inf
        %2004 = vmax.xlane.f32.xlu0 %v2003
        %v2005 = vpop.xlane.xlu0 %2004
        %v2006 = vsel %vm1987, %v1977, -inf
        %2007 = vmax.xlane.f32.xlu0 %v2006
        %v2008 = vpop.xlane.xlu0 %2007
        %v2009 = vsel %vm1987, %v1978, -inf
        %2010 = vmax.xlane.f32.xlu0 %v2009
        %v2011 = vpop.xlane.xlu0 %2010
        %v2012 = vsel %vm1987, %v1979, -inf
        %2013 = vmax.xlane.f32.xlu0 %v2012
        %v2014 = vpop.xlane.xlu0 %2013
        %v2015 = vsel %vm1987, %v1980, -inf
        %2016 = vmax.xlane.f32.xlu0 %v2015
        %v2017 = vpop.xlane.xlu0 %2016
        %v2018 = vsel %vm1987, %v1981, -inf
        %2019 = vmax.xlane.f32.xlu0 %v2018
        %v2020 = vpop.xlane.xlu0 %2019
        %v2021 = vsel %vm1987, %v1982, -inf
        %2022 = vmax.xlane.f32.xlu0 %v2021
        %v2023 = vpop.xlane.xlu0 %2022
        %v2024 = vsel %vm1987, %v1983, -inf
        %2025 = vmax.xlane.f32.xlu0 %v2024
        %v2026 = vpop.xlane.xlu0 %2025
        %v2027 = vsel %vm1987, %v1984, -inf
        %2028 = vmax.xlane.f32.xlu0 %v2027
        %v2029 = vpop.xlane.xlu0 %2028
        %v2030 = vsel %vm1987, %v1985, -inf
        %2031 = vmax.xlane.f32.xlu0 %v2030
        %v2032 = vpop.xlane.xlu0 %2031
        %v2033 = vsel %vm1987, %v1986, -inf
        %2034 = vmax.xlane.f32.xlu0 %v2033
        %v2035 = vpop.xlane.xlu0 %2034
        %v2036 = vsub.f32 %v1971, %v1990
        %v2037 = vsub.f32 %v1972, %v1993
        %v2038 = vsub.f32 %v1973, %v1996
        %v2039 = vsub.f32 %v1974, %v1999
        %v2040 = vsub.f32 %v1975, %v2002
        %v2041 = vsub.f32 %v1976, %v2005
        %v2042 = vsub.f32 %v1977, %v2008
        %v2043 = vsub.f32 %v1978, %v2011
        %v2044 = vsub.f32 %v1979, %v2014
        %v2045 = vsub.f32 %v1980, %v2017
        %v2046 = vsub.f32 %v1981, %v2020
        %v2047 = vsub.f32 %v1982, %v2023
        %v2048 = vsub.f32 %v1983, %v2026
        %v2049 = vsub.f32 %v1984, %v2029
        %v2050 = vsub.f32 %v1985, %v2032
        %v2051 = vsub.f32 %v1986, %v2035
        %v2052 = vmul.f32 %v2036, 1.442695
        %v2053 = vpow.pop %v2052
        %v2054 = vmul.f32 %v2037, 1.442695
        %v2055 = vpow.pop %v2054
        %v2056 = vmul.f32 %v2038, 1.442695
        %v2057 = vpow.pop %v2056
        %v2058 = vmul.f32 %v2039, 1.442695
        %v2059 = vpow.pop %v2058
        %v2060 = vmul.f32 %v2040, 1.442695
        %v2061 = vpow.pop %v2060
        %v2062 = vmul.f32 %v2041, 1.442695
        %v2063 = vpow.pop %v2062
        %v2064 = vmul.f32 %v2042, 1.442695
        %v2065 = vpow.pop %v2064
        %v2066 = vmul.f32 %v2043, 1.442695
        %v2067 = vpow.pop %v2066
        %v2068 = vmul.f32 %v2044, 1.442695
        %v2069 = vpow.pop %v2068
        %v2070 = vmul.f32 %v2045, 1.442695
        %v2071 = vpow.pop %v2070
        %v2072 = vmul.f32 %v2046, 1.442695
        %v2073 = vpow.pop %v2072
        %v2074 = vmul.f32 %v2047, 1.442695
        %v2075 = vpow.pop %v2074
        %v2076 = vmul.f32 %v2048, 1.442695
        %v2077 = vpow.pop %v2076
        %v2078 = vmul.f32 %v2049, 1.442695
        %v2079 = vpow.pop %v2078
        %v2080 = vmul.f32 %v2050, 1.442695
        %v2081 = vpow.pop %v2080
        %v2082 = vmul.f32 %v2051, 1.442695
        %v2083 = vpow.pop %v2082
        %v2084 = vsel %vm1987, %v2053, 0.0
        %2085 = vadd.xlane.f32.xlu0 %v2084
        %v2086 = vpop.xlane.xlu0 %2085
        %v2087 = vsel %vm1987, %v2055, 0.0
        %2088 = vadd.xlane.f32.xlu0 %v2087
        %v2089 = vpop.xlane.xlu0 %2088
        %v2090 = vsel %vm1987, %v2057, 0.0
        %2091 = vadd.xlane.f32.xlu0 %v2090
        %v2092 = vpop.xlane.xlu0 %2091
        %v2093 = vsel %vm1987, %v2059, 0.0
        %2094 = vadd.xlane.f32.xlu0 %v2093
        %v2095 = vpop.xlane.xlu0 %2094
        %v2096 = vsel %vm1987, %v2061, 0.0
        %2097 = vadd.xlane.f32.xlu0 %v2096
        %v2098 = vpop.xlane.xlu0 %2097
        %v2099 = vsel %vm1987, %v2063, 0.0
        %2100 = vadd.xlane.f32.xlu0 %v2099
        %v2101 = vpop.xlane.xlu0 %2100
        %v2102 = vsel %vm1987, %v2065, 0.0
        %2103 = vadd.xlane.f32.xlu0 %v2102
        %v2104 = vpop.xlane.xlu0 %2103
        %v2105 = vsel %vm1987, %v2067, 0.0
        %2106 = vadd.xlane.f32.xlu0 %v2105
        %v2107 = vpop.xlane.xlu0 %2106
        %v2108 = vsel %vm1987, %v2069, 0.0
        %2109 = vadd.xlane.f32.xlu0 %v2108
        %v2110 = vpop.xlane.xlu0 %2109
        %v2111 = vsel %vm1987, %v2071, 0.0
        %2112 = vadd.xlane.f32.xlu0 %v2111
        %v2113 = vpop.xlane.xlu0 %2112
        %v2114 = vsel %vm1987, %v2073, 0.0
        %2115 = vadd.xlane.f32.xlu0 %v2114
        %v2116 = vpop.xlane.xlu0 %2115
        %v2117 = vsel %vm1987, %v2075, 0.0
        %2118 = vadd.xlane.f32.xlu0 %v2117
        %v2119 = vpop.xlane.xlu0 %2118
        %v2120 = vsel %vm1987, %v2077, 0.0
        %2121 = vadd.xlane.f32.xlu0 %v2120
        %v2122 = vpop.xlane.xlu0 %2121
        %v2123 = vsel %vm1987, %v2079, 0.0
        %2124 = vadd.xlane.f32.xlu0 %v2123
        %v2125 = vpop.xlane.xlu0 %2124
        %v2126 = vsel %vm1987, %v2081, 0.0
        %2127 = vadd.xlane.f32.xlu0 %v2126
        %v2128 = vpop.xlane.xlu0 %2127
        %v2129 = vsel %vm1987, %v2083, 0.0
        %2130 = vadd.xlane.f32.xlu0 %v2129
        %v2131 = vpop.xlane.xlu0 %2130
        %v2132 = vrcp.pop %v2086
        %v2133 = vrcp.pop %v2089
        %v2134 = vrcp.pop %v2092
        %v2135 = vrcp.pop %v2095
        %v2136 = vrcp.pop %v2098
        %v2137 = vrcp.pop %v2101
        %v2138 = vrcp.pop %v2104
        %v2139 = vrcp.pop %v2107
        %v2140 = vrcp.pop %v2110
        %v2141 = vrcp.pop %v2113
        %v2142 = vrcp.pop %v2116
        %v2143 = vrcp.pop %v2119
        %v2144 = vrcp.pop %v2122
        %v2145 = vrcp.pop %v2125
        %v2146 = vrcp.pop %v2128
        %v2147 = vrcp.pop %v2131
        %v2148 = vmul.f32 %v2053, %v2132
        %v2149 = vmul.f32 %v2055, %v2133
        %v2150 = vmul.f32 %v2057, %v2134
        %v2151 = vmul.f32 %v2059, %v2135
        %v2152 = vmul.f32 %v2061, %v2136
        %v2153 = vmul.f32 %v2063, %v2137
        %v2154 = vmul.f32 %v2065, %v2138
        %v2155 = vmul.f32 %v2067, %v2139
        %v2156 = vmul.f32 %v2069, %v2140
        %v2157 = vmul.f32 %v2071, %v2141
        %v2158 = vmul.f32 %v2073, %v2142
        %v2159 = vmul.f32 %v2075, %v2143
        %v2160 = vmul.f32 %v2077, %v2144
        %v2161 = vmul.f32 %v2079, %v2145
        %v2162 = vmul.f32 %v2081, %v2146
        %v2163 = vmul.f32 %v2083, %v2147
        %v2164 = vsel %vm1970, %v2148, %v1888
        %v2165 = vsel %vm1970, %v2149, %v1893
        %v2166 = vsel %vm1970, %v2150, %v1898
        %v2167 = vsel %vm1970, %v2151, %v1903
        %v2168 = vsel %vm1970, %v2152, %v1908
        %v2169 = vsel %vm1970, %v2153, %v1913
        %v2170 = vsel %vm1970, %v2154, %v1918
        %v2171 = vsel %vm1970, %v2155, %v1923
        %v2172 = vsel %vm1970, %v2156, %v1928
        %v2173 = vsel %vm1970, %v2157, %v1933
        %v2174 = vsel %vm1970, %v2158, %v1938
        %v2175 = vsel %vm1970, %v2159, %v1943
        %v2176 = vsel %vm1970, %v2160, %v1948
        %v2177 = vsel %vm1970, %v2161, %v1953
        %v2178 = vsel %vm1970, %v2162, %v1958
        %v2179 = vsel %vm1970, %v2163, %v1963
        %2196 = vrot.lane.b32.xlu0 %v1030, 11
        %v2197 = vpop.permute.xlu0 %2196
        %2198 = vrot.lane.b32.xlu0 %v1035, 11
        %v2199 = vpop.permute.xlu0 %2198
        %2200 = vrot.lane.b32.xlu0 %v1040, 11
        %v2201 = vpop.permute.xlu0 %2200
        %2202 = vrot.lane.b32.xlu0 %v1045, 11
        %v2203 = vpop.permute.xlu0 %2202
        %2204 = vrot.lane.b32.xlu0 %v1050, 11
        %v2205 = vpop.permute.xlu0 %2204
        %2206 = vrot.lane.b32.xlu0 %v1055, 11
        %v2207 = vpop.permute.xlu0 %2206
        %2208 = vrot.lane.b32.xlu0 %v1060, 11
        %v2209 = vpop.permute.xlu0 %2208
        %2210 = vrot.lane.b32.xlu0 %v1065, 11
        %v2211 = vpop.permute.xlu0 %2210
        %2212 = vrot.lane.b32.xlu0 %v1070, 11
        %v2213 = vpop.permute.xlu0 %2212
        %2214 = vrot.lane.b32.xlu0 %v1075, 11
        %v2215 = vpop.permute.xlu0 %2214
        %2216 = vrot.lane.b32.xlu0 %v1080, 11
        %v2217 = vpop.permute.xlu0 %2216
        %2218 = vrot.lane.b32.xlu0 %v1085, 11
        %v2219 = vpop.permute.xlu0 %2218
        %2220 = vrot.lane.b32.xlu0 %v1090, 11
        %v2221 = vpop.permute.xlu0 %2220
        %2222 = vrot.lane.b32.xlu0 %v1095, 11
        %v2223 = vpop.permute.xlu0 %2222
        %2224 = vrot.lane.b32.xlu0 %v1100, 11
        %v2225 = vpop.permute.xlu0 %2224
        %2226 = vrot.lane.b32.xlu0 %v1105, 11
        %v2227 = vpop.permute.xlu0 %2226
        %v2244 = vsel %vm1987, %v2164, %v2197
        %v2245 = vsel %vm1987, %v2165, %v2199
        %v2246 = vsel %vm1987, %v2166, %v2201
        %v2247 = vsel %vm1987, %v2167, %v2203
        %v2248 = vsel %vm1987, %v2168, %v2205
        %v2249 = vsel %vm1987, %v2169, %v2207
        %v2250 = vsel %vm1987, %v2170, %v2209
        %v2251 = vsel %vm1987, %v2171, %v2211
        %v2252 = vsel %vm1987, %v2172, %v2213
        %v2253 = vsel %vm1987, %v2173, %v2215
        %v2254 = vsel %vm1987, %v2174, %v2217
        %v2255 = vsel %vm1987, %v2175, %v2219
        %v2256 = vsel %vm1987, %v2176, %v2221
        %v2257 = vsel %vm1987, %v2177, %v2223
        %v2258 = vsel %vm1987, %v2178, %v2225
        %v2259 = vsel %vm1987, %v2179, %v2227
        %vm2260 = vcmask 121856
        %v2261 = vsel %vm2260, %v2244, 0.0
        %v2262 = vsel %vm2260, %v2245, 0.0
        %v2263 = vsel %vm2260, %v2246, 0.0
        %v2264 = vsel %vm2260, %v2247, 0.0
        %v2265 = vsel %vm2260, %v2248, 0.0
        %v2266 = vsel %vm2260, %v2249, 0.0
        %v2267 = vsel %vm2260, %v2250, 0.0
        %v2268 = vsel %vm2260, %v2251, 0.0
        %v2269 = vsel %vm2260, %v2252, 0.0
        %v2270 = vsel %vm2260, %v2253, 0.0
        %v2271 = vsel %vm2260, %v2254, 0.0
        %v2272 = vsel %vm2260, %v2255, 0.0
        %v2273 = vsel %vm2260, %v2256, 0.0
        %v2274 = vsel %vm2260, %v2257, 0.0
        %v2275 = vsel %vm2260, %v2258, 0.0
        %v2276 = vsel %vm2260, %v2259, 0.0
        %2277 = vst [vmem:[%s434] sm:$0xff] %v2261
        %2278 = vst [vmem:[%s434 + $0x8] sm:$0xff] %v2262
        %2279 = vst [vmem:[%s434 + $0x10] sm:$0xff] %v2263
        %2280 = vst [vmem:[%s434 + $0x18] sm:$0xff] %v2264
        %2281 = vst [vmem:[%s434 + $0x20] sm:$0xff] %v2265
        %2282 = vst [vmem:[%s434 + $0x28] sm:$0xff] %v2266
        %2283 = vst [vmem:[%s434 + $0x30] sm:$0xff] %v2267
        %2284 = vst [vmem:[%s434 + $0x38] sm:$0xff] %v2268
        %2285 = vst [vmem:[%s434 + $0x40] sm:$0xff] %v2269
        %2286 = vst [vmem:[%s434 + $0x48] sm:$0xff] %v2270
        %2287 = vst [vmem:[%s434 + $0x50] sm:$0xff] %v2271
        %2288 = vst [vmem:[%s434 + $0x58] sm:$0xff] %v2272
        %2289 = vst [vmem:[%s434 + $0x60] sm:$0xff] %v2273
        %2290 = vst [vmem:[%s434 + $0x68] sm:$0xff] %v2274
        %2291 = vst [vmem:[%s434 + $0x70] sm:$0xff] %v2275
        %2292 = vst [vmem:[%s434 + $0x78] sm:$0xff] %v2276
        %s2293 = sand.u32 %s313, 1
        %s2294 = scalar_lea.sflag [#allocation3], %s2293
        %s2295 = sand.u32 %s313, 1
        %s2296 = smul.addr %s2295, 128
        %s2297 = scalar_lea.vmem [#allocation2], %s2296
        // Predicated region
        $region73: #{tpu_custom_call.1} parent=71 // pred_check
          %p2298 = pneg %p323
        $region74: #{tpu_custom_call.1} parent=71 // pred_check_branch
          %2300 = sbr.rel (%p2298) target = $region76
        $region75: #{tpu_custom_call.1} parent=71 // pred_region
          %s2301 = smul.u32 16, %s27
          %s2303 = ssub.s32 2048, 2048
          %2304 = vsyncadd %s2294, %s2303
          %s2305 = smul.addr %s2301, 128
          %s2306 = scalar_lea.hbm %s13, %s2305
          %s2307 = sshll.u32 %s2297, 4
          %s2308 = int_to_ptr.vmem [resolvable:$true] %s2307
          %2313 = dma.vmem_to_hbm [thread:$0]  %s2308, 2048, %s2306, %s2294, 128, 128, 8
        $region76: #{tpu_custom_call.1} parent=71 // pred_fallthru
          _
      $region72: #{tpu_custom_call.1} parent=5 // pred_fallthru
        _
      %p2314 = scmp.le.s32.totalorder 2, %s22
      // Predicated region
      $region77: #{tpu_custom_call.1} parent=5 // pred_check
        %p2315 = pneg %p2314
      $region78: #{tpu_custom_call.1} parent=5 // pred_check_branch
        %2317 = sbr.rel (%p2315) target = $region80
      $region79: #{tpu_custom_call.1} parent=5 // pred_region
        %s2318 = ssub.s32 %s22, 2
        // Predicated region
        $region81: #{tpu_custom_call.1} parent=79 // pred_check
          %p2319 = pneg %p329
        $region82: #{tpu_custom_call.1} parent=79 // pred_check_branch
          %2321 = sbr.rel (%p2319) target = $region84
        $region83: #{tpu_custom_call.1} parent=79 // pred_region
          %s2322 = sand.u32 %s314, 1
          %s2323 = scalar_lea.sflag [#allocation3], %s2322
          %s2324 = sand.u32 %s314, 1
          %s2325 = smul.addr %s2324, 128
          %s2326 = scalar_lea.vmem [#allocation2], %s2325
          %2327 = dma.done %s2323, 2048
        $region84: #{tpu_custom_call.1} parent=79 // pred_fallthru
          _
      $region80: #{tpu_custom_call.1} parent=5 // pred_fallthru
        _
    $region6: #{tpu_custom_call.1} parent=1 // loop_footer
      %s26 = sadd.s32 1, %s22
    $region7: #{tpu_custom_call.1} parent=1 // loop_footer_branch
      %21 = sbr.rel target = $region3
    $region8: #{tpu_custom_call.1} parent=1 // loop_exit
      _
    %2328 = vsyncpa [#allocation3], 1
    %s2329 = scalar_lea.sflag [#allocation3], 1
    %2330 = vsyncpa %s2329, 1

</llo_original>
